<compile_context>
chip_gen: v5e
topology: v5e:2x2
jax: 0.10.0
libtpu: 0.0.40
codegen_flags: <defaults>
</compile_context>

<pallas_src>
import functools
import math

import jax
import jax.numpy as jnp
from jax.experimental import pallas as pl
from jax.experimental.pallas import tpu as pltpu

LEAKY_SLOPE = 0.01  # PyTorch F.leaky_relu default
LANE = 128


def _round_up(x, m):
    return ((x + m - 1) // m) * m


def mlp_kernel(x_ref, w_ref, b_ref, o_ref, *, saturate: bool, compute_dtype,
               dfold, col_offs):
    """One batch tile of the full 4-layer MLP on lane-folded activations.

    x_ref: (TB, dfold[0])      folded activations (compute_dtype)
    w_ref: (R,  sum(dfold[1:]))  packed block-diagonal weights (compute_dtype)
    b_ref: (1,  sum(dfold[1:]))  packed folded biases (f32)
    o_ref: (TB, dfold[4])      folded output tile (compute_dtype)
    """
    h = x_ref[...]
    if h.dtype != compute_dtype:
        h = h.astype(compute_dtype)

    y = None
    for layer in range(4):  # unrolled; static lane/sublane-aligned slices are free views
        din, dout, off = dfold[layer], dfold[layer + 1], col_offs[layer]
        acc = jnp.dot(h, w_ref[:din, off:off + dout],
                      preferred_element_type=jnp.float32)
        acc = acc + b_ref[:, off:off + dout]          # f32 bias add on the VPU
        if layer < 3:
            acc = jnp.maximum(acc, LEAKY_SLOPE * acc)  # leaky_relu: one mul + one max
            h = acc.astype(compute_dtype)
        else:
            y = acc

    if saturate:
        y = 2.0 * jnp.tanh(y)  # EUP transcendental, f32

    o_ref[...] = y.astype(o_ref.dtype)


def init_params(key, input_dim, output_dim, hidden_dims, dtype=jnp.float32):
    """nn.Linear-style init: U(-1/sqrt(fan_in), 1/sqrt(fan_in)).

    Weights returned as (in_features, out_features) (= PyTorch W.T), biases (out,).
    """
    dims = [input_dim] + list(hidden_dims) + [output_dim]
    params = []
    for i in range(4):
        fan_in, fan_out = dims[i], dims[i + 1]
        key, kw, kb = jax.random.split(key, 3)
        bound = 1.0 / (fan_in ** 0.5)
        w = jax.random.uniform(kw, (fan_in, fan_out), dtype, minval=-bound, maxval=bound)
        b = jax.random.uniform(kb, (fan_out,), dtype, minval=-bound, maxval=bound)
        params.append((w, b))
    return params


def _pack_params_folded(params, slots, fold, w_dtype, R, C, col_offs):
    """Pack per-layer weights block-diagonally (fold copies) into one (R, C) slab.

    Layer i weight (fan_in, fan_out) is zero-padded to (slots[i], slots[i+1]) and
    replicated fold times on the diagonal: kron(I_fold, W).  Biases are tiled fold times.
    """
    eye = jnp.eye(fold, dtype=jnp.float32)
    w_slab = jnp.zeros((R, C), jnp.float32)
    b_slab = jnp.zeros((1, C), jnp.float32)
    for i, (w, b) in enumerate(params):
        fi, fo = w.shape
        si, so = slots[i], slots[i + 1]
        wp = jnp.zeros((si, so), jnp.float32).at[:fi, :fo].set(w.astype(jnp.float32))
        bp = jnp.zeros((so,), jnp.float32).at[:fo].set(b.astype(jnp.float32))
        off = col_offs[i]
        w_slab = w_slab.at[:fold * si, off:off + fold * so].set(jnp.kron(eye, wp))
        b_slab = b_slab.at[0, off:off + fold * so].set(jnp.tile(bp, fold))
    return w_slab.astype(w_dtype), b_slab  # biases stay f32


def neural_networks_forward(x, params, saturate=False,
                            compute_dtype=jnp.bfloat16, fold=8, block_rows=512):
    """Pallas forward pass.

    compute_dtype=bf16 (default) halves HBM/VMEM bytes and feeds the MXU its native dtype;
    accumulation and all elementwise math stay f32.  `fold` samples share one folded row.
    """
    batch, in_dim = x.shape
    out_dim = params[-1][0].shape[1]
    compute_dtype = jnp.dtype(compute_dtype)

    dims = [params[0][0].shape[0]] + [w.shape[1] for w, _ in params]
    assert dims[0] == in_dim

    # Per-sample slot widths padded so that fold*slot is a multiple of 128 lanes.
    slot_mult = LANE // math.gcd(fold, LANE)
    slots = [_round_up(d, slot_mult) for d in dims]
    dfold = [fold * s for s in slots]                     # folded lane widths (x128)

    col_offs, c = [], 0
    for i in range(4):
        col_offs.append(c)
        c += dfold[i + 1]
    C = c                                                 # packed slab width
    R = max(dfold[:4])                                    # packed slab height

    w_slab, b_slab = _pack_params_folded(params, slots, fold, compute_dtype, R, C, col_offs)

    # Batch tiling over folded rows (each row = `fold` samples).  bf16 packs 16 rows/vreg.
    sub_pack = 16 if compute_dtype == jnp.dtype(jnp.bfloat16) else 8
    rows = pl.cdiv(batch, fold)
    tb = min(_round_up(block_rows, sub_pack), _round_up(rows, sub_pack))
    rows_pad = _round_up(rows, tb)
    grid = (rows_pad // tb,)

    d0, d_out = slots[0], slots[4]
    xp = jnp.zeros((rows_pad * fold, d0), compute_dtype)
    xp = xp.at[:batch, :in_dim].set(x.astype(compute_dtype))
    xp = xp.reshape(rows_pad, fold * d0)                  # lane-fold: sample s -> (s//fold, (s%fold)*d0)

    flops = int(2 * rows_pad * sum(dfold[i] * dfold[i + 1] for i in range(4)))
    transcendentals = int(rows_pad * dfold[4]) if saturate else 0
    bytes_accessed = int(
        xp.size * xp.dtype.itemsize
        + w_slab.size * w_slab.dtype.itemsize
        + b_slab.size * b_slab.dtype.itemsize
        + rows_pad * dfold[4] * compute_dtype.itemsize    # output stream (compute_dtype)
    )

    kernel = functools.partial(mlp_kernel, saturate=saturate, compute_dtype=compute_dtype,
                               dfold=tuple(dfold), col_offs=tuple(col_offs))

    out_padded = pl.pallas_call(
        kernel,
        out_shape=jax.ShapeDtypeStruct((rows_pad, dfold[4]), compute_dtype),
        grid=grid,
        in_specs=[
            pl.BlockSpec((tb, dfold[0]), lambda i: (i, 0)),   # folded x tile (pipelined)
            pl.BlockSpec((R, C), lambda i: (0, 0)),           # weights: VMEM-resident
            pl.BlockSpec((1, C), lambda i: (0, 0)),           # biases:  VMEM-resident
        ],
        out_specs=pl.BlockSpec((tb, dfold[4]), lambda i: (i, 0)),
        compiler_params=pltpu.CompilerParams(
            dimension_semantics=("parallel",),                # shard batch grid across TCs on v7x
        ),
        cost_estimate=pl.CostEstimate(flops=flops,
                                      transcendentals=transcendentals,
                                      bytes_accessed=bytes_accessed),
    )(xp, w_slab, b_slab)

    # Unfold: (rows_pad, fold*d_out) -> (rows_pad*fold, d_out) -> real samples/features.
    out = out_padded.reshape(rows_pad * fold, d_out)[:batch, :out_dim]
    return out.astype(x.dtype)                               # cheap upcast on the real slice only


def reference_forward(x, params, saturate=False):
    (w1, b1), (w2, b2), (w3, b3), (w4, b4) = params
    h = jax.nn.leaky_relu(x @ w1 + b1, LEAKY_SLOPE)
    h = jax.nn.leaky_relu(h @ w2 + b2, LEAKY_SLOPE)
    h = jax.nn.leaky_relu(h @ w3 + b3, LEAKY_SLOPE)
    y = h @ w4 + b4
    if saturate:
        y = 2.0 * jnp.tanh(y)
    return y


if __name__ == "__main__":
    key = jax.random.PRNGKey(0)

    batch = 8
    input_dim = 32
    hidden_dims = (64, 64, 32)
    output_dim = 16

    kx, kp, kx2 = jax.random.split(key, 3)
    x = jax.random.normal(kx, (batch, input_dim), jnp.float32)
    params = init_params(kp, input_dim, output_dim, hidden_dims)

    # Exact-semantics path (f32 MXU inputs): tight tolerance vs reference.
    out = jax.block_until_ready(
        neural_networks_forward(x, params, saturate=False, compute_dtype=jnp.float32))
    ref = reference_forward(x, params, saturate=False)
    assert out.shape == (batch, output_dim)
    assert jnp.allclose(out, ref, atol=1e-4, rtol=1e-4)

    out_s = jax.block_until_ready(
        neural_networks_forward(x, params, saturate=True, compute_dtype=jnp.float32))
    ref_s = reference_forward(x, params, saturate=True)
    assert jnp.allclose(out_s, ref_s, atol=1e-4, rtol=1e-4)

    # Perf path (bf16 MXU inputs + bf16 output stream, f32 accumulation) — default config.
    out_bf = jax.block_until_ready(
        neural_networks_forward(x, params, saturate=True, compute_dtype=jnp.bfloat16))
    assert out_bf.shape == (batch, output_dim)
    assert jnp.allclose(out_bf, ref_s, atol=1e-1, rtol=1e-1)

    # Ragged batch (not a multiple of fold) across multiple pipelined grid steps.
    x2 = jax.random.normal(kx2, (200, input_dim), jnp.float32)
    out2 = jax.block_until_ready(
        neural_networks_forward(x2, params, saturate=True,
                                compute_dtype=jnp.float32, block_rows=16))
    ref2 = reference_forward(x2, params, saturate=True)
    assert out2.shape == (200, output_dim)
    assert jnp.allclose(out2, ref2, atol=1e-4, rtol=1e-4)

    print("KERNEL_OK")
</pallas_src>

<mosaic_0001>
module attributes {stable_mosaic.version = 11 : i64} {
  func.func @mlp_kernel(%arg0: i32, %arg1: memref<8x256xf32, #tpu.memory_space<vmem>>, %arg2: memref<512x1408xf32, #tpu.memory_space<vmem>>, %arg3: memref<1x1408xf32, #tpu.memory_space<vmem>>, %arg4: memref<8x128xf32, #tpu.memory_space<vmem>>) attributes {dimension_semantics = [#tpu.dimension_semantics<parallel>], iteration_bounds = array<i64: 1>, scalar_prefetch = 0 : i64, scratch_operands = 0 : i64, tpu.core_type = #tpu.core_type<tc>, window_params = [{transform_indices = @transform_0, window_bounds = array<i64: 8, 256>}, {pipeline_mode = #tpu.pipeline_mode<synchronous>, transform_indices = @transform_1, window_bounds = array<i64: 512, 1408>}, {pipeline_mode = #tpu.pipeline_mode<synchronous>, transform_indices = @transform_2, window_bounds = array<i64: 1, 1408>}, {transform_indices = @transform_3, window_bounds = array<i64: 8, 128>}]} {
    %c0 = arith.constant 0 : index
    %c0_0 = arith.constant 0 : index
    %0 = vector.load %arg1[%c0, %c0_0] : memref<8x256xf32, #tpu.memory_space<vmem>>, vector<8x256xf32>
    %c0_1 = arith.constant 0 : index
    %c0_2 = arith.constant 0 : index
    %1 = vector.load %arg2[%c0_1, %c0_2] : memref<512x1408xf32, #tpu.memory_space<vmem>>, vector<256x512xf32>
    %cst = arith.constant dense<0.000000e+00> : vector<8x512xf32>
    %2 = tpu.matmul %0, %1, %cst {dimension_numbers = #tpu.dot_dimension_numbers<[1], [0], [0], [1], [0, 0, 1, 1], [], []>} : vector<8x256xf32>, vector<256x512xf32>, vector<8x512xf32> -> vector<8x512xf32>
    %c0_3 = arith.constant 0 : index
    %c0_4 = arith.constant 0 : index
    %3 = vector.load %arg3[%c0_3, %c0_4] : memref<1x1408xf32, #tpu.memory_space<vmem>>, vector<1x512xf32>
    %4 = vector.broadcast %3 : vector<1x512xf32> to vector<8x512xf32>
    %5 = arith.addf %2, %4 : vector<8x512xf32>
    %cst_5 = arith.constant 0.00999999977 : f32
    %6 = vector.broadcast %cst_5 : f32 to vector<8x512xf32>
    %7 = arith.mulf %6, %5 : vector<8x512xf32>
    %8 = arith.maximumf %5, %7 : vector<8x512xf32>
    %c0_6 = arith.constant 0 : index
    %c512 = arith.constant 512 : index
    %9 = vector.load %arg2[%c0_6, %c512] : memref<512x1408xf32, #tpu.memory_space<vmem>>, vector<512x512xf32>
    %cst_7 = arith.constant dense<0.000000e+00> : vector<8x512xf32>
    %10 = tpu.matmul %8, %9, %cst_7 {dimension_numbers = #tpu.dot_dimension_numbers<[1], [0], [0], [1], [0, 0, 1, 1], [], []>} : vector<8x512xf32>, vector<512x512xf32>, vector<8x512xf32> -> vector<8x512xf32>
    %c0_8 = arith.constant 0 : index
    %c512_9 = arith.constant 512 : index
    %11 = vector.load %arg3[%c0_8, %c512_9] : memref<1x1408xf32, #tpu.memory_space<vmem>>, vector<1x512xf32>
    %12 = vector.broadcast %11 : vector<1x512xf32> to vector<8x512xf32>
    %13 = arith.addf %10, %12 : vector<8x512xf32>
    %cst_10 = arith.constant 0.00999999977 : f32
    %14 = vector.broadcast %cst_10 : f32 to vector<8x512xf32>
    %15 = arith.mulf %14, %13 : vector<8x512xf32>
    %16 = arith.maximumf %13, %15 : vector<8x512xf32>
    %c0_11 = arith.constant 0 : index
    %c1024 = arith.constant 1024 : index
    %17 = vector.load %arg2[%c0_11, %c1024] : memref<512x1408xf32, #tpu.memory_space<vmem>>, vector<512x256xf32>
    %cst_12 = arith.constant dense<0.000000e+00> : vector<8x256xf32>
    %18 = tpu.matmul %16, %17, %cst_12 {dimension_numbers = #tpu.dot_dimension_numbers<[1], [0], [0], [1], [0, 0, 1, 1], [], []>} : vector<8x512xf32>, vector<512x256xf32>, vector<8x256xf32> -> vector<8x256xf32>
    %c0_13 = arith.constant 0 : index
    %c1024_14 = arith.constant 1024 : index
    %19 = vector.load %arg3[%c0_13, %c1024_14] : memref<1x1408xf32, #tpu.memory_space<vmem>>, vector<1x256xf32>
    %20 = vector.broadcast %19 : vector<1x256xf32> to vector<8x256xf32>
    %21 = arith.addf %18, %20 : vector<8x256xf32>
    %cst_15 = arith.constant 0.00999999977 : f32
    %22 = vector.broadcast %cst_15 : f32 to vector<8x256xf32>
    %23 = arith.mulf %22, %21 : vector<8x256xf32>
    %24 = arith.maximumf %21, %23 : vector<8x256xf32>
    %c0_16 = arith.constant 0 : index
    %c1280 = arith.constant 1280 : index
    %25 = vector.load %arg2[%c0_16, %c1280] : memref<512x1408xf32, #tpu.memory_space<vmem>>, vector<256x128xf32>
    %cst_17 = arith.constant dense<0.000000e+00> : vector<8x128xf32>
    %26 = tpu.matmul %24, %25, %cst_17 {dimension_numbers = #tpu.dot_dimension_numbers<[1], [0], [0], [1], [0, 0, 1, 1], [], []>} : vector<8x256xf32>, vector<256x128xf32>, vector<8x128xf32> -> vector<8x128xf32>
    %c0_18 = arith.constant 0 : index
    %c1280_19 = arith.constant 1280 : index
    %27 = vector.load %arg3[%c0_18, %c1280_19] : memref<1x1408xf32, #tpu.memory_space<vmem>>, vector<1x128xf32>
    %28 = vector.broadcast %27 : vector<1x128xf32> to vector<8x128xf32>
    %29 = arith.addf %26, %28 : vector<8x128xf32>
    %c0_20 = arith.constant 0 : index
    %c0_21 = arith.constant 0 : index
    %30 = vector.load %arg4[%c0_20, %c0_21] : memref<8x128xf32, #tpu.memory_space<vmem>>, vector<8x128xf32>
    tpu.vector_store %arg4[%c0_20, %c0_21], %29 {strides = array<i32>} : memref<8x128xf32, #tpu.memory_space<vmem>>, vector<8x128xf32>,
    return
  }
  func.func @transform_0(%arg0: i32) -> (i32, i32) {
    %c0_i32 = arith.constant 0 : i32
    %c0_i32_0 = arith.constant 0 : i32
    return %arg0, %c0_i32 : i32, i32
  }
  func.func @transform_1(%arg0: i32) -> (i32, i32) {
    %c0_i32 = arith.constant 0 : i32
    %c0_i32_0 = arith.constant 0 : i32
    %c0_i32_1 = arith.constant 0 : i32
    return %c0_i32, %c0_i32_0 : i32, i32
  }
  func.func @transform_2(%arg0: i32) -> (i32, i32) {
    %c0_i32 = arith.constant 0 : i32
    %c0_i32_0 = arith.constant 0 : i32
    %c0_i32_1 = arith.constant 0 : i32
    return %c0_i32, %c0_i32_0 : i32, i32
  }
  func.func @transform_3(%arg0: i32) -> (i32, i32) {
    %c0_i32 = arith.constant 0 : i32
    %c0_i32_0 = arith.constant 0 : i32
    return %arg0, %c0_i32 : i32, i32
  }
}

</mosaic_0001>

<llo_original>
// kernel: tpu_custom_call.1
$region0: #{tpu_custom_call.1}
  #allocation0 [shape = 'u32[]', space=smem, size = 0x4, offset = 0x4, fixed_abs, tag = 'smem constant byte address 0x4 - core index']
  #allocation1 [shape = 'u32[72,128]{1,0:T(1,128)}', space=vmem, size = 0x9000, scoped, tag = 'internal scratch']
  %s0 = inlined_call_operand.hbm [shape: f32[8,256], index: 0, kind: input, shape index: {}]
  %s1 = inlined_call_operand.hbm [shape: f32[512,1408], index: 1, kind: input, shape index: {}]
  %s2 = inlined_call_operand.hbm [shape: f32[1,1408], index: 2, kind: input, shape index: {}]
  %s3 = inlined_call_operand.hbm [shape: f32[8,128], index: 3, kind: output, shape index: {}]
  %s4 = sld [smem:[#allocation0]]
  $region34: #{tpu_custom_call.1} parent=0
    _
  %s6 = ssub.s32 1, %s4
  %s7 = scalar_select 0, %s6, %s4
  $region1: #{tpu_custom_call.1} parent=0
    #allocation2 [shape = 'u8[8192]{0}', space=vmem, size = 0x2000, scoped, tag = 'input window, operand 0, single buffered']
    #allocation3 [shape = 's32[1]{0}', space=sflag, size = 0x4, scoped, tag = 'scoped memory for tpu_custom_call.1']
    #allocation4 [shape = 's32[1]{0}', space=sflag, size = 0x4, scoped, tag = 'scoped memory for tpu_custom_call.1']
    #allocation5 [shape = 'u8[2883584]{0}', space=vmem, size = 0x2c0000, scoped, tag = 'input window, operand 1, single buffered']
    #allocation6 [shape = 's32[1]{0}', space=sflag, size = 0x4, scoped, tag = 'scoped memory for tpu_custom_call.1']
    #allocation7 [shape = 'u8[5632]{0}', space=vmem, size = 0x1800, scoped, tag = 'input window, operand 2, single buffered']
    #allocation8 [shape = 'u8[4096]{0}', space=vmem, size = 0x1000, scoped, tag = 'output window, operand 0, single buffered']
    %8 = vsyncpa [#allocation3], 0
    %9 = vsyncpa [#allocation6], 0
    %10 = vsyncpa [#allocation4], 0
    // Predicated region
    $region2: #{tpu_custom_call.1} parent=1 // pred_check
      _
    $region3: #{tpu_custom_call.1} parent=1 // pred_check_branch
      %12 = sbr.rel (0) target = $region5
    $region4: #{tpu_custom_call.1} parent=1 // pred_region
      %14 = vsyncadd [#allocation3], 0
      %s16 = sshll.u32 %s0, 4
      %s17 = int_to_ptr.hbm [resolvable:$true] %s16
      %s18 = sshll.u32 [#allocation2], 4
      %s19 = int_to_ptr.vmem [resolvable:$true] %s18
      %21 = dma.hbm_to_vmem [thread:$0]  %s17, 256, %s19, [#allocation3]
    $region5: #{tpu_custom_call.1} parent=1 // pred_fallthru
      _
    // Predicated region
    $region6: #{tpu_custom_call.1} parent=1 // pred_check
      _
    $region7: #{tpu_custom_call.1} parent=1 // pred_check_branch
      %23 = sbr.rel (0) target = $region9
    $region8: #{tpu_custom_call.1} parent=1 // pred_region
      %25 = vsyncadd [#allocation6], 0
      %s26 = sshll.u32 %s1, 4
      %s27 = int_to_ptr.hbm [resolvable:$true] %s26
      %s28 = sshll.u32 [#allocation5], 4
      %s29 = int_to_ptr.vmem [resolvable:$true] %s28
      %34 = dma.hbm_to_vmem [thread:$0]  %s27, 90112, %s29, [#allocation6], 1408, 1408, 88
    $region9: #{tpu_custom_call.1} parent=1 // pred_fallthru
      _
    // Predicated region
    $region10: #{tpu_custom_call.1} parent=1 // pred_check
      _
    $region11: #{tpu_custom_call.1} parent=1 // pred_check_branch
      %36 = sbr.rel (0) target = $region13
    $region12: #{tpu_custom_call.1} parent=1 // pred_region
      %38 = vsyncadd [#allocation6], 0
      %s40 = sshll.u32 %s2, 4
      %s41 = int_to_ptr.hbm [resolvable:$true] %s40
      %s42 = sshll.u32 [#allocation7], 4
      %s43 = int_to_ptr.vmem [resolvable:$true] %s42
      %45 = dma.hbm_to_vmem [thread:$0]  %s41, 176, %s43, [#allocation6]
    $region13: #{tpu_custom_call.1} parent=1 // pred_fallthru
      _
    // Predicated region
    $region14: #{tpu_custom_call.1} parent=1 // pred_check
      _
    $region15: #{tpu_custom_call.1} parent=1 // pred_check_branch
      %47 = sbr.rel (0) target = $region17
    $region16: #{tpu_custom_call.1} parent=1 // pred_region
      %49 = dma.done [#allocation3], 256
    $region17: #{tpu_custom_call.1} parent=1 // pred_fallthru
      _
    // Predicated region
    $region18: #{tpu_custom_call.1} parent=1 // pred_check
      _
    $region19: #{tpu_custom_call.1} parent=1 // pred_check_branch
      %51 = sbr.rel (0) target = $region21
    $region20: #{tpu_custom_call.1} parent=1 // pred_region
      %53 = dma.done [#allocation6], 90112
    $region21: #{tpu_custom_call.1} parent=1 // pred_fallthru
      _
    // Predicated region
    $region22: #{tpu_custom_call.1} parent=1 // pred_check
      _
    $region23: #{tpu_custom_call.1} parent=1 // pred_check_branch
      %55 = sbr.rel (0) target = $region25
    $region24: #{tpu_custom_call.1} parent=1 // pred_region
      %57 = dma.done [#allocation6], 176
    $region25: #{tpu_custom_call.1} parent=1 // pred_fallthru
      _
    %v58 = vld [vmem:[#allocation2] sm:$0xff]
    %v59 = vld [vmem:[#allocation2 + $0x8] sm:$0xff]
    %v60 = vld [vmem:[#allocation5] sm:$0xff]
    %v61 = vld [vmem:[#allocation5 + $0x8] sm:$0xff]
    %v62 = vld [vmem:[#allocation5 + $0x10] sm:$0xff]
    %v63 = vld [vmem:[#allocation5 + $0x18] sm:$0xff]
    %v64 = vld [vmem:[#allocation5 + $0x58] sm:$0xff]
    %v65 = vld [vmem:[#allocation5 + $0x60] sm:$0xff]
    %v66 = vld [vmem:[#allocation5 + $0x68] sm:$0xff]
    %v67 = vld [vmem:[#allocation5 + $0x70] sm:$0xff]
    %v68 = vld [vmem:[#allocation5 + $0xb0] sm:$0xff]
    %v69 = vld [vmem:[#allocation5 + $0xb8] sm:$0xff]
    %v70 = vld [vmem:[#allocation5 + $0xc0] sm:$0xff]
    %v71 = vld [vmem:[#allocation5 + $0xc8] sm:$0xff]
    %v72 = vld [vmem:[#allocation5 + $0x108] sm:$0xff]
    %v73 = vld [vmem:[#allocation5 + $0x110] sm:$0xff]
    %v74 = vld [vmem:[#allocation5 + $0x118] sm:$0xff]
    %v75 = vld [vmem:[#allocation5 + $0x120] sm:$0xff]
    %v76 = vld [vmem:[#allocation5 + $0x160] sm:$0xff]
    %v77 = vld [vmem:[#allocation5 + $0x168] sm:$0xff]
    %v78 = vld [vmem:[#allocation5 + $0x170] sm:$0xff]
    %v79 = vld [vmem:[#allocation5 + $0x178] sm:$0xff]
    %v80 = vld [vmem:[#allocation5 + $0x1b8] sm:$0xff]
    %v81 = vld [vmem:[#allocation5 + $0x1c0] sm:$0xff]
    %v82 = vld [vmem:[#allocation5 + $0x1c8] sm:$0xff]
    %v83 = vld [vmem:[#allocation5 + $0x1d0] sm:$0xff]
    %v84 = vld [vmem:[#allocation5 + $0x210] sm:$0xff]
    %v85 = vld [vmem:[#allocation5 + $0x218] sm:$0xff]
    %v86 = vld [vmem:[#allocation5 + $0x220] sm:$0xff]
    %v87 = vld [vmem:[#allocation5 + $0x228] sm:$0xff]
    %v88 = vld [vmem:[#allocation5 + $0x268] sm:$0xff]
    %v89 = vld [vmem:[#allocation5 + $0x270] sm:$0xff]
    %v90 = vld [vmem:[#allocation5 + $0x278] sm:$0xff]
    %v91 = vld [vmem:[#allocation5 + $0x280] sm:$0xff]
    %v92 = vld [vmem:[#allocation5 + $0x2c0] sm:$0xff]
    %v93 = vld [vmem:[#allocation5 + $0x2c8] sm:$0xff]
    %v94 = vld [vmem:[#allocation5 + $0x2d0] sm:$0xff]
    %v95 = vld [vmem:[#allocation5 + $0x2d8] sm:$0xff]
    %v96 = vld [vmem:[#allocation5 + $0x318] sm:$0xff]
    %v97 = vld [vmem:[#allocation5 + $0x320] sm:$0xff]
    %v98 = vld [vmem:[#allocation5 + $0x328] sm:$0xff]
    %v99 = vld [vmem:[#allocation5 + $0x330] sm:$0xff]
    %v100 = vld [vmem:[#allocation5 + $0x370] sm:$0xff]
    %v101 = vld [vmem:[#allocation5 + $0x378] sm:$0xff]
    %v102 = vld [vmem:[#allocation5 + $0x380] sm:$0xff]
    %v103 = vld [vmem:[#allocation5 + $0x388] sm:$0xff]
    %v104 = vld [vmem:[#allocation5 + $0x3c8] sm:$0xff]
    %v105 = vld [vmem:[#allocation5 + $0x3d0] sm:$0xff]
    %v106 = vld [vmem:[#allocation5 + $0x3d8] sm:$0xff]
    %v107 = vld [vmem:[#allocation5 + $0x3e0] sm:$0xff]
    %v108 = vld [vmem:[#allocation5 + $0x420] sm:$0xff]
    %v109 = vld [vmem:[#allocation5 + $0x428] sm:$0xff]
    %v110 = vld [vmem:[#allocation5 + $0x430] sm:$0xff]
    %v111 = vld [vmem:[#allocation5 + $0x438] sm:$0xff]
    %v112 = vld [vmem:[#allocation5 + $0x478] sm:$0xff]
    %v113 = vld [vmem:[#allocation5 + $0x480] sm:$0xff]
    %v114 = vld [vmem:[#allocation5 + $0x488] sm:$0xff]
    %v115 = vld [vmem:[#allocation5 + $0x490] sm:$0xff]
    %v116 = vld [vmem:[#allocation5 + $0x4d0] sm:$0xff]
    %v117 = vld [vmem:[#allocation5 + $0x4d8] sm:$0xff]
    %v118 = vld [vmem:[#allocation5 + $0x4e0] sm:$0xff]
    %v119 = vld [vmem:[#allocation5 + $0x4e8] sm:$0xff]
    %v120 = vld [vmem:[#allocation5 + $0x528] sm:$0xff]
    %v121 = vld [vmem:[#allocation5 + $0x530] sm:$0xff]
    %v122 = vld [vmem:[#allocation5 + $0x538] sm:$0xff]
    %v123 = vld [vmem:[#allocation5 + $0x540] sm:$0xff]
    %v124 = vld [vmem:[#allocation5 + $0x580] sm:$0xff]
    %v125 = vld [vmem:[#allocation5 + $0x588] sm:$0xff]
    %v126 = vld [vmem:[#allocation5 + $0x590] sm:$0xff]
    %v127 = vld [vmem:[#allocation5 + $0x598] sm:$0xff]
    %v128 = vld [vmem:[#allocation5 + $0x5d8] sm:$0xff]
    %v129 = vld [vmem:[#allocation5 + $0x5e0] sm:$0xff]
    %v130 = vld [vmem:[#allocation5 + $0x5e8] sm:$0xff]
    %v131 = vld [vmem:[#allocation5 + $0x5f0] sm:$0xff]
    %v132 = vld [vmem:[#allocation5 + $0x630] sm:$0xff]
    %v133 = vld [vmem:[#allocation5 + $0x638] sm:$0xff]
    %v134 = vld [vmem:[#allocation5 + $0x640] sm:$0xff]
    %v135 = vld [vmem:[#allocation5 + $0x648] sm:$0xff]
    %v136 = vld [vmem:[#allocation5 + $0x688] sm:$0xff]
    %v137 = vld [vmem:[#allocation5 + $0x690] sm:$0xff]
    %v138 = vld [vmem:[#allocation5 + $0x698] sm:$0xff]
    %v139 = vld [vmem:[#allocation5 + $0x6a0] sm:$0xff]
    %v140 = vld [vmem:[#allocation5 + $0x6e0] sm:$0xff]
    %v141 = vld [vmem:[#allocation5 + $0x6e8] sm:$0xff]
    %v142 = vld [vmem:[#allocation5 + $0x6f0] sm:$0xff]
    %v143 = vld [vmem:[#allocation5 + $0x6f8] sm:$0xff]
    %v144 = vld [vmem:[#allocation5 + $0x738] sm:$0xff]
    %v145 = vld [vmem:[#allocation5 + $0x740] sm:$0xff]
    %v146 = vld [vmem:[#allocation5 + $0x748] sm:$0xff]
    %v147 = vld [vmem:[#allocation5 + $0x750] sm:$0xff]
    %v148 = vld [vmem:[#allocation5 + $0x790] sm:$0xff]
    %v149 = vld [vmem:[#allocation5 + $0x798] sm:$0xff]
    %v150 = vld [vmem:[#allocation5 + $0x7a0] sm:$0xff]
    %v151 = vld [vmem:[#allocation5 + $0x7a8] sm:$0xff]
    %v152 = vld [vmem:[#allocation5 + $0x7e8] sm:$0xff]
    %v153 = vld [vmem:[#allocation5 + $0x7f0] sm:$0xff]
    %v154 = vld [vmem:[#allocation5 + $0x7f8] sm:$0xff]
    %v155 = vld [vmem:[#allocation5 + $0x800] sm:$0xff]
    %v156 = vld [vmem:[#allocation5 + $0x840] sm:$0xff]
    %v157 = vld [vmem:[#allocation5 + $0x848] sm:$0xff]
    %v158 = vld [vmem:[#allocation5 + $0x850] sm:$0xff]
    %v159 = vld [vmem:[#allocation5 + $0x858] sm:$0xff]
    %v160 = vld [vmem:[#allocation5 + $0x898] sm:$0xff]
    %v161 = vld [vmem:[#allocation5 + $0x8a0] sm:$0xff]
    %v162 = vld [vmem:[#allocation5 + $0x8a8] sm:$0xff]
    %v163 = vld [vmem:[#allocation5 + $0x8b0] sm:$0xff]
    %v164 = vld [vmem:[#allocation5 + $0x8f0] sm:$0xff]
    %v165 = vld [vmem:[#allocation5 + $0x8f8] sm:$0xff]
    %v166 = vld [vmem:[#allocation5 + $0x900] sm:$0xff]
    %v167 = vld [vmem:[#allocation5 + $0x908] sm:$0xff]
    %v168 = vld [vmem:[#allocation5 + $0x948] sm:$0xff]
    %v169 = vld [vmem:[#allocation5 + $0x950] sm:$0xff]
    %v170 = vld [vmem:[#allocation5 + $0x958] sm:$0xff]
    %v171 = vld [vmem:[#allocation5 + $0x960] sm:$0xff]
    %v172 = vld [vmem:[#allocation5 + $0x9a0] sm:$0xff]
    %v173 = vld [vmem:[#allocation5 + $0x9a8] sm:$0xff]
    %v174 = vld [vmem:[#allocation5 + $0x9b0] sm:$0xff]
    %v175 = vld [vmem:[#allocation5 + $0x9b8] sm:$0xff]
    %v176 = vld [vmem:[#allocation5 + $0x9f8] sm:$0xff]
    %v177 = vld [vmem:[#allocation5 + $0xa00] sm:$0xff]
    %v178 = vld [vmem:[#allocation5 + $0xa08] sm:$0xff]
    %v179 = vld [vmem:[#allocation5 + $0xa10] sm:$0xff]
    %v180 = vld [vmem:[#allocation5 + $0xa50] sm:$0xff]
    %v181 = vld [vmem:[#allocation5 + $0xa58] sm:$0xff]
    %v182 = vld [vmem:[#allocation5 + $0xa60] sm:$0xff]
    %v183 = vld [vmem:[#allocation5 + $0xa68] sm:$0xff]
    %v184 = vld [vmem:[#allocation5 + $0xaa8] sm:$0xff]
    %v185 = vld [vmem:[#allocation5 + $0xab0] sm:$0xff]
    %v186 = vld [vmem:[#allocation5 + $0xab8] sm:$0xff]
    %v187 = vld [vmem:[#allocation5 + $0xac0] sm:$0xff]
    %v188 = vld [vmem:[#allocation7] sm:$0xf]
    %v190 = vperm.slane %v188, 0
    %v191 = vperm.slane %v188, 1
    %v192 = vperm.slane %v188, 2
    %v193 = vperm.slane %v188, 3
    %198 = vmatpush.msra.mxu0 %v120
    %199 = vmatpush.msra.mxu0 %v116
    %200 = vmatpush.msra.mxu0 %v112
    %201 = vmatpush.msra.mxu0 %v108
    %202 = vmatpush.msra.mxu0 %v104
    %203 = vmatpush.msra.mxu0 %v100
    %204 = vmatpush.msra.mxu0 %v96
    %205 = vmatpush.msra.mxu0 %v92
    %206 = vmatpush.msra.mxu0 %v88
    %207 = vmatpush.msra.mxu0 %v84
    %208 = vmatpush.msra.mxu0 %v80
    %209 = vmatpush.msra.mxu0 %v76
    %210 = vmatpush.msra.mxu0 %v72
    %211 = vmatpush.msra.mxu0 %v68
    %212 = vmatpush.msra.mxu0 %v64
    %213 = vmatpush.msra.mxu0 %v60
    %214 = vmatmul.f32.gmra.mxu0 %v58
    %v215 = vpop.f32.mrf.mxu0
    %v216 = vadd.f32 %v190, %v215
    %217 = vdwg.mxu0
    %218 = vmatpush.msra.mxu0 %v184
    %219 = vmatpush.msra.mxu0 %v180
    %220 = vmatpush.msra.mxu0 %v176
    %221 = vmatpush.msra.mxu0 %v172
    %222 = vmatpush.msra.mxu0 %v168
    %223 = vmatpush.msra.mxu0 %v164
    %224 = vmatpush.msra.mxu0 %v160
    %225 = vmatpush.msra.mxu0 %v156
    %226 = vmatpush.msra.mxu0 %v152
    %227 = vmatpush.msra.mxu0 %v148
    %228 = vmatpush.msra.mxu0 %v144
    %229 = vmatpush.msra.mxu0 %v140
    %230 = vmatpush.msra.mxu0 %v136
    %231 = vmatpush.msra.mxu0 %v132
    %232 = vmatpush.msra.mxu0 %v128
    %233 = vmatpush.msra.mxu0 %v124
    %234 = vmatmul.f32.gmra.mxu0 %v59
    %v235 = vpop.f32.mrf.mxu0
    %v236 = vadd.f32 %v216, %v235
    %237 = vdwg.mxu0
    %238 = vmatpush.msra.mxu0 %v121
    %239 = vmatpush.msra.mxu0 %v117
    %240 = vmatpush.msra.mxu0 %v113
    %241 = vmatpush.msra.mxu0 %v109
    %242 = vmatpush.msra.mxu0 %v105
    %243 = vmatpush.msra.mxu0 %v101
    %244 = vmatpush.msra.mxu0 %v97
    %245 = vmatpush.msra.mxu0 %v93
    %246 = vmatpush.msra.mxu0 %v89
    %247 = vmatpush.msra.mxu0 %v85
    %248 = vmatpush.msra.mxu0 %v81
    %249 = vmatpush.msra.mxu0 %v77
    %250 = vmatpush.msra.mxu0 %v73
    %251 = vmatpush.msra.mxu0 %v69
    %252 = vmatpush.msra.mxu0 %v65
    %253 = vmatpush.msra.mxu0 %v61
    %254 = vmatmul.f32.gmra.mxu0 %v58
    %v255 = vpop.f32.mrf.mxu0
    %v256 = vadd.f32 %v191, %v255
    %257 = vdwg.mxu0
    %258 = vmatpush.msra.mxu0 %v185
    %259 = vmatpush.msra.mxu0 %v181
    %260 = vmatpush.msra.mxu0 %v177
    %261 = vmatpush.msra.mxu0 %v173
    %262 = vmatpush.msra.mxu0 %v169
    %263 = vmatpush.msra.mxu0 %v165
    %264 = vmatpush.msra.mxu0 %v161
    %265 = vmatpush.msra.mxu0 %v157
    %266 = vmatpush.msra.mxu0 %v153
    %267 = vmatpush.msra.mxu0 %v149
    %268 = vmatpush.msra.mxu0 %v145
    %269 = vmatpush.msra.mxu0 %v141
    %270 = vmatpush.msra.mxu0 %v137
    %271 = vmatpush.msra.mxu0 %v133
    %272 = vmatpush.msra.mxu0 %v129
    %273 = vmatpush.msra.mxu0 %v125
    %274 = vmatmul.f32.gmra.mxu0 %v59
    %v275 = vpop.f32.mrf.mxu0
    %v276 = vadd.f32 %v256, %v275
    %277 = vdwg.mxu0
    %278 = vmatpush.msra.mxu0 %v122
    %279 = vmatpush.msra.mxu0 %v118
    %280 = vmatpush.msra.mxu0 %v114
    %281 = vmatpush.msra.mxu0 %v110
    %282 = vmatpush.msra.mxu0 %v106
    %283 = vmatpush.msra.mxu0 %v102
    %284 = vmatpush.msra.mxu0 %v98
    %285 = vmatpush.msra.mxu0 %v94
    %286 = vmatpush.msra.mxu0 %v90
    %287 = vmatpush.msra.mxu0 %v86
    %288 = vmatpush.msra.mxu0 %v82
    %289 = vmatpush.msra.mxu0 %v78
    %290 = vmatpush.msra.mxu0 %v74
    %291 = vmatpush.msra.mxu0 %v70
    %292 = vmatpush.msra.mxu0 %v66
    %293 = vmatpush.msra.mxu0 %v62
    %294 = vmatmul.f32.gmra.mxu0 %v58
    %v295 = vpop.f32.mrf.mxu0
    %v296 = vadd.f32 %v192, %v295
    %297 = vdwg.mxu0
    %298 = vmatpush.msra.mxu0 %v186
    %299 = vmatpush.msra.mxu0 %v182
    %300 = vmatpush.msra.mxu0 %v178
    %301 = vmatpush.msra.mxu0 %v174
    %302 = vmatpush.msra.mxu0 %v170
    %303 = vmatpush.msra.mxu0 %v166
    %304 = vmatpush.msra.mxu0 %v162
    %305 = vmatpush.msra.mxu0 %v158
    %306 = vmatpush.msra.mxu0 %v154
    %307 = vmatpush.msra.mxu0 %v150
    %308 = vmatpush.msra.mxu0 %v146
    %309 = vmatpush.msra.mxu0 %v142
    %310 = vmatpush.msra.mxu0 %v138
    %311 = vmatpush.msra.mxu0 %v134
    %312 = vmatpush.msra.mxu0 %v130
    %313 = vmatpush.msra.mxu0 %v126
    %314 = vmatmul.f32.gmra.mxu0 %v59
    %v315 = vpop.f32.mrf.mxu0
    %v316 = vadd.f32 %v296, %v315
    %317 = vdwg.mxu0
    %318 = vmatpush.msra.mxu0 %v123
    %319 = vmatpush.msra.mxu0 %v119
    %320 = vmatpush.msra.mxu0 %v115
    %321 = vmatpush.msra.mxu0 %v111
    %322 = vmatpush.msra.mxu0 %v107
    %323 = vmatpush.msra.mxu0 %v103
    %324 = vmatpush.msra.mxu0 %v99
    %325 = vmatpush.msra.mxu0 %v95
    %326 = vmatpush.msra.mxu0 %v91
    %327 = vmatpush.msra.mxu0 %v87
    %328 = vmatpush.msra.mxu0 %v83
    %329 = vmatpush.msra.mxu0 %v79
    %330 = vmatpush.msra.mxu0 %v75
    %331 = vmatpush.msra.mxu0 %v71
    %332 = vmatpush.msra.mxu0 %v67
    %333 = vmatpush.msra.mxu0 %v63
    %334 = vmatmul.f32.gmra.mxu0 %v58
    %v335 = vpop.f32.mrf.mxu0
    %v336 = vadd.f32 %v193, %v335
    %337 = vdwg.mxu0
    %338 = vmatpush.msra.mxu0 %v187
    %339 = vmatpush.msra.mxu0 %v183
    %340 = vmatpush.msra.mxu0 %v179
    %341 = vmatpush.msra.mxu0 %v175
    %342 = vmatpush.msra.mxu0 %v171
    %343 = vmatpush.msra.mxu0 %v167
    %344 = vmatpush.msra.mxu0 %v163
    %345 = vmatpush.msra.mxu0 %v159
    %346 = vmatpush.msra.mxu0 %v155
    %347 = vmatpush.msra.mxu0 %v151
    %348 = vmatpush.msra.mxu0 %v147
    %349 = vmatpush.msra.mxu0 %v143
    %350 = vmatpush.msra.mxu0 %v139
    %351 = vmatpush.msra.mxu0 %v135
    %352 = vmatpush.msra.mxu0 %v131
    %353 = vmatpush.msra.mxu0 %v127
    %354 = vmatmul.f32.gmra.mxu0 %v59
    %v355 = vpop.f32.mrf.mxu0
    %v356 = vadd.f32 %v336, %v355
    %357 = vdwg.mxu0
    %v358 = vmul.f32 %v236, 0.01
    %v359 = vmul.f32 %v276, 0.01
    %v360 = vmul.f32 %v316, 0.01
    %v361 = vmul.f32 %v356, 0.01
    %v362 = vmax.f32 %v236, %v358
    %v363 = vmax.f32 %v276, %v359
    %v364 = vmax.f32 %v316, %v360
    %v365 = vmax.f32 %v356, %v361
    %v366 = vld [vmem:[#allocation5 + $0x20] sm:$0xff]
    %v367 = vld [vmem:[#allocation5 + $0x28] sm:$0xff]
    %v368 = vld [vmem:[#allocation5 + $0x30] sm:$0xff]
    %v369 = vld [vmem:[#allocation5 + $0x38] sm:$0xff]
    %v370 = vld [vmem:[#allocation5 + $0x78] sm:$0xff]
    %v371 = vld [vmem:[#allocation5 + $0x80] sm:$0xff]
    %v372 = vld [vmem:[#allocation5 + $0x88] sm:$0xff]
    %v373 = vld [vmem:[#allocation5 + $0x90] sm:$0xff]
    %v374 = vld [vmem:[#allocation5 + $0xd0] sm:$0xff]
    %v375 = vld [vmem:[#allocation5 + $0xd8] sm:$0xff]
    %v376 = vld [vmem:[#allocation5 + $0xe0] sm:$0xff]
    %v377 = vld [vmem:[#allocation5 + $0xe8] sm:$0xff]
    %v378 = vld [vmem:[#allocation5 + $0x128] sm:$0xff]
    %v379 = vld [vmem:[#allocation5 + $0x130] sm:$0xff]
    %v380 = vld [vmem:[#allocation5 + $0x138] sm:$0xff]
    %v381 = vld [vmem:[#allocation5 + $0x140] sm:$0xff]
    %v382 = vld [vmem:[#allocation5 + $0x180] sm:$0xff]
    %v383 = vld [vmem:[#allocation5 + $0x188] sm:$0xff]
    %v384 = vld [vmem:[#allocation5 + $0x190] sm:$0xff]
    %v385 = vld [vmem:[#allocation5 + $0x198] sm:$0xff]
    %v386 = vld [vmem:[#allocation5 + $0x1d8] sm:$0xff]
    %v387 = vld [vmem:[#allocation5 + $0x1e0] sm:$0xff]
    %v388 = vld [vmem:[#allocation5 + $0x1e8] sm:$0xff]
    %v389 = vld [vmem:[#allocation5 + $0x1f0] sm:$0xff]
    %v390 = vld [vmem:[#allocation5 + $0x230] sm:$0xff]
    %v391 = vld [vmem:[#allocation5 + $0x238] sm:$0xff]
    %v392 = vld [vmem:[#allocation5 + $0x240] sm:$0xff]
    %v393 = vld [vmem:[#allocation5 + $0x248] sm:$0xff]
    %v394 = vld [vmem:[#allocation5 + $0x288] sm:$0xff]
    %v395 = vld [vmem:[#allocation5 + $0x290] sm:$0xff]
    %v396 = vld [vmem:[#allocation5 + $0x298] sm:$0xff]
    %v397 = vld [vmem:[#allocation5 + $0x2a0] sm:$0xff]
    %v398 = vld [vmem:[#allocation5 + $0x2e0] sm:$0xff]
    %v399 = vld [vmem:[#allocation5 + $0x2e8] sm:$0xff]
    %v400 = vld [vmem:[#allocation5 + $0x2f0] sm:$0xff]
    %v401 = vld [vmem:[#allocation5 + $0x2f8] sm:$0xff]
    %v402 = vld [vmem:[#allocation5 + $0x338] sm:$0xff]
    %v403 = vld [vmem:[#allocation5 + $0x340] sm:$0xff]
    %v404 = vld [vmem:[#allocation5 + $0x348] sm:$0xff]
    %v405 = vld [vmem:[#allocation5 + $0x350] sm:$0xff]
    %v406 = vld [vmem:[#allocation5 + $0x390] sm:$0xff]
    %v407 = vld [vmem:[#allocation5 + $0x398] sm:$0xff]
    %v408 = vld [vmem:[#allocation5 + $0x3a0] sm:$0xff]
    %v409 = vld [vmem:[#allocation5 + $0x3a8] sm:$0xff]
    %v410 = vld [vmem:[#allocation5 + $0x3e8] sm:$0xff]
    %v411 = vld [vmem:[#allocation5 + $0x3f0] sm:$0xff]
    %v412 = vld [vmem:[#allocation5 + $0x3f8] sm:$0xff]
    %v413 = vld [vmem:[#allocation5 + $0x400] sm:$0xff]
    %v414 = vld [vmem:[#allocation5 + $0x440] sm:$0xff]
    %v415 = vld [vmem:[#allocation5 + $0x448] sm:$0xff]
    %v416 = vld [vmem:[#allocation5 + $0x450] sm:$0xff]
    %v417 = vld [vmem:[#allocation5 + $0x458] sm:$0xff]
    %v418 = vld [vmem:[#allocation5 + $0x498] sm:$0xff]
    %v419 = vld [vmem:[#allocation5 + $0x4a0] sm:$0xff]
    %v420 = vld [vmem:[#allocation5 + $0x4a8] sm:$0xff]
    %v421 = vld [vmem:[#allocation5 + $0x4b0] sm:$0xff]
    %v422 = vld [vmem:[#allocation5 + $0x4f0] sm:$0xff]
    %v423 = vld [vmem:[#allocation5 + $0x4f8] sm:$0xff]
    %v424 = vld [vmem:[#allocation5 + $0x500] sm:$0xff]
    %v425 = vld [vmem:[#allocation5 + $0x508] sm:$0xff]
    %v426 = vld [vmem:[#allocation5 + $0x548] sm:$0xff]
    %v427 = vld [vmem:[#allocation5 + $0x550] sm:$0xff]
    %v428 = vld [vmem:[#allocation5 + $0x558] sm:$0xff]
    %v429 = vld [vmem:[#allocation5 + $0x560] sm:$0xff]
    %v430 = vld [vmem:[#allocation5 + $0x5a0] sm:$0xff]
    %v431 = vld [vmem:[#allocation5 + $0x5a8] sm:$0xff]
    %v432 = vld [vmem:[#allocation5 + $0x5b0] sm:$0xff]
    %v433 = vld [vmem:[#allocation5 + $0x5b8] sm:$0xff]
    %v434 = vld [vmem:[#allocation5 + $0x5f8] sm:$0xff]
    %v435 = vld [vmem:[#allocation5 + $0x600] sm:$0xff]
    %v436 = vld [vmem:[#allocation5 + $0x608] sm:$0xff]
    %v437 = vld [vmem:[#allocation5 + $0x610] sm:$0xff]
    %v438 = vld [vmem:[#allocation5 + $0x650] sm:$0xff]
    %v439 = vld [vmem:[#allocation5 + $0x658] sm:$0xff]
    %v440 = vld [vmem:[#allocation5 + $0x660] sm:$0xff]
    %v441 = vld [vmem:[#allocation5 + $0x668] sm:$0xff]
    %v442 = vld [vmem:[#allocation5 + $0x6a8] sm:$0xff]
    %v443 = vld [vmem:[#allocation5 + $0x6b0] sm:$0xff]
    %v444 = vld [vmem:[#allocation5 + $0x6b8] sm:$0xff]
    %v445 = vld [vmem:[#allocation5 + $0x6c0] sm:$0xff]
    %v446 = vld [vmem:[#allocation5 + $0x700] sm:$0xff]
    %v447 = vld [vmem:[#allocation5 + $0x708] sm:$0xff]
    %v448 = vld [vmem:[#allocation5 + $0x710] sm:$0xff]
    %v449 = vld [vmem:[#allocation5 + $0x718] sm:$0xff]
    %v450 = vld [vmem:[#allocation5 + $0x758] sm:$0xff]
    %v451 = vld [vmem:[#allocation5 + $0x760] sm:$0xff]
    %v452 = vld [vmem:[#allocation5 + $0x768] sm:$0xff]
    %v453 = vld [vmem:[#allocation5 + $0x770] sm:$0xff]
    %v454 = vld [vmem:[#allocation5 + $0x7b0] sm:$0xff]
    %v455 = vld [vmem:[#allocation5 + $0x7b8] sm:$0xff]
    %v456 = vld [vmem:[#allocation5 + $0x7c0] sm:$0xff]
    %v457 = vld [vmem:[#allocation5 + $0x7c8] sm:$0xff]
    %v458 = vld [vmem:[#allocation5 + $0x808] sm:$0xff]
    %v459 = vld [vmem:[#allocation5 + $0x810] sm:$0xff]
    %v460 = vld [vmem:[#allocation5 + $0x818] sm:$0xff]
    %v461 = vld [vmem:[#allocation5 + $0x820] sm:$0xff]
    %v462 = vld [vmem:[#allocation5 + $0x860] sm:$0xff]
    %v463 = vld [vmem:[#allocation5 + $0x868] sm:$0xff]
    %v464 = vld [vmem:[#allocation5 + $0x870] sm:$0xff]
    %v465 = vld [vmem:[#allocation5 + $0x878] sm:$0xff]
    %v466 = vld [vmem:[#allocation5 + $0x8b8] sm:$0xff]
    %v467 = vld [vmem:[#allocation5 + $0x8c0] sm:$0xff]
    %v468 = vld [vmem:[#allocation5 + $0x8c8] sm:$0xff]
    %v469 = vld [vmem:[#allocation5 + $0x8d0] sm:$0xff]
    %v470 = vld [vmem:[#allocation5 + $0x910] sm:$0xff]
    %v471 = vld [vmem:[#allocation5 + $0x918] sm:$0xff]
    %v472 = vld [vmem:[#allocation5 + $0x920] sm:$0xff]
    %v473 = vld [vmem:[#allocation5 + $0x928] sm:$0xff]
    %v474 = vld [vmem:[#allocation5 + $0x968] sm:$0xff]
    %v475 = vld [vmem:[#allocation5 + $0x970] sm:$0xff]
    %v476 = vld [vmem:[#allocation5 + $0x978] sm:$0xff]
    %v477 = vld [vmem:[#allocation5 + $0x980] sm:$0xff]
    %v478 = vld [vmem:[#allocation5 + $0x9c0] sm:$0xff]
    %v479 = vld [vmem:[#allocation5 + $0x9c8] sm:$0xff]
    %v480 = vld [vmem:[#allocation5 + $0x9d0] sm:$0xff]
    %v481 = vld [vmem:[#allocation5 + $0x9d8] sm:$0xff]
    %v482 = vld [vmem:[#allocation5 + $0xa18] sm:$0xff]
    %v483 = vld [vmem:[#allocation5 + $0xa20] sm:$0xff]
    %v484 = vld [vmem:[#allocation5 + $0xa28] sm:$0xff]
    %v485 = vld [vmem:[#allocation5 + $0xa30] sm:$0xff]
    %v486 = vld [vmem:[#allocation5 + $0xa70] sm:$0xff]
    %v487 = vld [vmem:[#allocation5 + $0xa78] sm:$0xff]
    %v488 = vld [vmem:[#allocation5 + $0xa80] sm:$0xff]
    %v489 = vld [vmem:[#allocation5 + $0xa88] sm:$0xff]
    %v490 = vld [vmem:[#allocation5 + $0xac8] sm:$0xff]
    %v491 = vld [vmem:[#allocation5 + $0xad0] sm:$0xff]
    %v492 = vld [vmem:[#allocation5 + $0xad8] sm:$0xff]
    %v493 = vld [vmem:[#allocation5 + $0xae0] sm:$0xff]
    %v494 = vld [vmem:[#allocation5 + $0xb20] sm:$0xff]
    %v495 = vld [vmem:[#allocation5 + $0xb28] sm:$0xff]
    %v496 = vld [vmem:[#allocation5 + $0xb30] sm:$0xff]
    %v497 = vld [vmem:[#allocation5 + $0xb38] sm:$0xff]
    %v498 = vld [vmem:[#allocation5 + $0xb78] sm:$0xff]
    %v499 = vld [vmem:[#allocation5 + $0xb80] sm:$0xff]
    %v500 = vld [vmem:[#allocation5 + $0xb88] sm:$0xff]
    %v501 = vld [vmem:[#allocation5 + $0xb90] sm:$0xff]
    %v502 = vld [vmem:[#allocation5 + $0xbd0] sm:$0xff]
    %v503 = vld [vmem:[#allocation5 + $0xbd8] sm:$0xff]
    %v504 = vld [vmem:[#allocation5 + $0xbe0] sm:$0xff]
    %v505 = vld [vmem:[#allocation5 + $0xbe8] sm:$0xff]
    %v506 = vld [vmem:[#allocation5 + $0xc28] sm:$0xff]
    %v507 = vld [vmem:[#allocation5 + $0xc30] sm:$0xff]
    %v508 = vld [vmem:[#allocation5 + $0xc38] sm:$0xff]
    %v509 = vld [vmem:[#allocation5 + $0xc40] sm:$0xff]
    %v510 = vld [vmem:[#allocation5 + $0xc80] sm:$0xff]
    %v511 = vld [vmem:[#allocation5 + $0xc88] sm:$0xff]
    %v512 = vld [vmem:[#allocation5 + $0xc90] sm:$0xff]
    %v513 = vld [vmem:[#allocation5 + $0xc98] sm:$0xff]
    %v514 = vld [vmem:[#allocation5 + $0xcd8] sm:$0xff]
    %v515 = vld [vmem:[#allocation5 + $0xce0] sm:$0xff]
    %v516 = vld [vmem:[#allocation5 + $0xce8] sm:$0xff]
    %v517 = vld [vmem:[#allocation5 + $0xcf0] sm:$0xff]
    %v518 = vld [vmem:[#allocation5 + $0xd30] sm:$0xff]
    %v519 = vld [vmem:[#allocation5 + $0xd38] sm:$0xff]
    %v520 = vld [vmem:[#allocation5 + $0xd40] sm:$0xff]
    %v521 = vld [vmem:[#allocation5 + $0xd48] sm:$0xff]
    %v522 = vld [vmem:[#allocation5 + $0xd88] sm:$0xff]
    %v523 = vld [vmem:[#allocation5 + $0xd90] sm:$0xff]
    %v524 = vld [vmem:[#allocation5 + $0xd98] sm:$0xff]
    %v525 = vld [vmem:[#allocation5 + $0xda0] sm:$0xff]
    %v526 = vld [vmem:[#allocation5 + $0xde0] sm:$0xff]
    %v527 = vld [vmem:[#allocation5 + $0xde8] sm:$0xff]
    %v528 = vld [vmem:[#allocation5 + $0xdf0] sm:$0xff]
    %v529 = vld [vmem:[#allocation5 + $0xdf8] sm:$0xff]
    %v530 = vld [vmem:[#allocation5 + $0xe38] sm:$0xff]
    %v531 = vld [vmem:[#allocation5 + $0xe40] sm:$0xff]
    %v532 = vld [vmem:[#allocation5 + $0xe48] sm:$0xff]
    %v533 = vld [vmem:[#allocation5 + $0xe50] sm:$0xff]
    %v534 = vld [vmem:[#allocation5 + $0xe90] sm:$0xff]
    %v535 = vld [vmem:[#allocation5 + $0xe98] sm:$0xff]
    %v536 = vld [vmem:[#allocation5 + $0xea0] sm:$0xff]
    %v537 = vld [vmem:[#allocation5 + $0xea8] sm:$0xff]
    %v538 = vld [vmem:[#allocation5 + $0xee8] sm:$0xff]
    %v539 = vld [vmem:[#allocation5 + $0xef0] sm:$0xff]
    %v540 = vld [vmem:[#allocation5 + $0xef8] sm:$0xff]
    %v541 = vld [vmem:[#allocation5 + $0xf00] sm:$0xff]
    %v542 = vld [vmem:[#allocation5 + $0xf40] sm:$0xff]
    %v543 = vld [vmem:[#allocation5 + $0xf48] sm:$0xff]
    %v544 = vld [vmem:[#allocation5 + $0xf50] sm:$0xff]
    %v545 = vld [vmem:[#allocation5 + $0xf58] sm:$0xff]
    %v546 = vld [vmem:[#allocation5 + $0xf98] sm:$0xff]
    %v547 = vld [vmem:[#allocation5 + $0xfa0] sm:$0xff]
    %v548 = vld [vmem:[#allocation5 + $0xfa8] sm:$0xff]
    %v549 = vld [vmem:[#allocation5 + $0xfb0] sm:$0xff]
    %v550 = vld [vmem:[#allocation5 + $0xff0] sm:$0xff]
    %v551 = vld [vmem:[#allocation5 + $0xff8] sm:$0xff]
    %v552 = vld [vmem:[#allocation5 + $0x1000] sm:$0xff]
    %v553 = vld [vmem:[#allocation5 + $0x1008] sm:$0xff]
    %v554 = vld [vmem:[#allocation5 + $0x1048] sm:$0xff]
    %v555 = vld [vmem:[#allocation5 + $0x1050] sm:$0xff]
    %v556 = vld [vmem:[#allocation5 + $0x1058] sm:$0xff]
    %v557 = vld [vmem:[#allocation5 + $0x1060] sm:$0xff]
    %v558 = vld [vmem:[#allocation5 + $0x10a0] sm:$0xff]
    %v559 = vld [vmem:[#allocation5 + $0x10a8] sm:$0xff]
    %v560 = vld [vmem:[#allocation5 + $0x10b0] sm:$0xff]
    %v561 = vld [vmem:[#allocation5 + $0x10b8] sm:$0xff]
    %v562 = vld [vmem:[#allocation5 + $0x10f8] sm:$0xff]
    %v563 = vld [vmem:[#allocation5 + $0x1100] sm:$0xff]
    %v564 = vld [vmem:[#allocation5 + $0x1108] sm:$0xff]
    %v565 = vld [vmem:[#allocation5 + $0x1110] sm:$0xff]
    %v566 = vld [vmem:[#allocation5 + $0x1150] sm:$0xff]
    %v567 = vld [vmem:[#allocation5 + $0x1158] sm:$0xff]
    %v568 = vld [vmem:[#allocation5 + $0x1160] sm:$0xff]
    %v569 = vld [vmem:[#allocation5 + $0x1168] sm:$0xff]
    %v570 = vld [vmem:[#allocation5 + $0x11a8] sm:$0xff]
    %v571 = vld [vmem:[#allocation5 + $0x11b0] sm:$0xff]
    %v572 = vld [vmem:[#allocation5 + $0x11b8] sm:$0xff]
    %v573 = vld [vmem:[#allocation5 + $0x11c0] sm:$0xff]
    %v574 = vld [vmem:[#allocation5 + $0x1200] sm:$0xff]
    %v575 = vld [vmem:[#allocation5 + $0x1208] sm:$0xff]
    %v576 = vld [vmem:[#allocation5 + $0x1210] sm:$0xff]
    %v577 = vld [vmem:[#allocation5 + $0x1218] sm:$0xff]
    %v578 = vld [vmem:[#allocation5 + $0x1258] sm:$0xff]
    %v579 = vld [vmem:[#allocation5 + $0x1260] sm:$0xff]
    %v580 = vld [vmem:[#allocation5 + $0x1268] sm:$0xff]
    %v581 = vld [vmem:[#allocation5 + $0x1270] sm:$0xff]
    %v582 = vld [vmem:[#allocation5 + $0x12b0] sm:$0xff]
    %v583 = vld [vmem:[#allocation5 + $0x12b8] sm:$0xff]
    %v584 = vld [vmem:[#allocation5 + $0x12c0] sm:$0xff]
    %v585 = vld [vmem:[#allocation5 + $0x12c8] sm:$0xff]
    %v586 = vld [vmem:[#allocation5 + $0x1308] sm:$0xff]
    %v587 = vld [vmem:[#allocation5 + $0x1310] sm:$0xff]
    %v588 = vld [vmem:[#allocation5 + $0x1318] sm:$0xff]
    %v589 = vld [vmem:[#allocation5 + $0x1320] sm:$0xff]
    %v590 = vld [vmem:[#allocation5 + $0x1360] sm:$0xff]
    %v591 = vld [vmem:[#allocation5 + $0x1368] sm:$0xff]
    %v592 = vld [vmem:[#allocation5 + $0x1370] sm:$0xff]
    %v593 = vld [vmem:[#allocation5 + $0x1378] sm:$0xff]
    %v594 = vld [vmem:[#allocation5 + $0x13b8] sm:$0xff]
    %v595 = vld [vmem:[#allocation5 + $0x13c0] sm:$0xff]
    %v596 = vld [vmem:[#allocation5 + $0x13c8] sm:$0xff]
    %v597 = vld [vmem:[#allocation5 + $0x13d0] sm:$0xff]
    %v598 = vld [vmem:[#allocation5 + $0x1410] sm:$0xff]
    %v599 = vld [vmem:[#allocation5 + $0x1418] sm:$0xff]
    %v600 = vld [vmem:[#allocation5 + $0x1420] sm:$0xff]
    %v601 = vld [vmem:[#allocation5 + $0x1428] sm:$0xff]
    %v602 = vld [vmem:[#allocation5 + $0x1468] sm:$0xff]
    %v603 = vld [vmem:[#allocation5 + $0x1470] sm:$0xff]
    %v604 = vld [vmem:[#allocation5 + $0x1478] sm:$0xff]
    %v605 = vld [vmem:[#allocation5 + $0x1480] sm:$0xff]
    %v606 = vld [vmem:[#allocation5 + $0x14c0] sm:$0xff]
    %v607 = vld [vmem:[#allocation5 + $0x14c8] sm:$0xff]
    %v608 = vld [vmem:[#allocation5 + $0x14d0] sm:$0xff]
    %v609 = vld [vmem:[#allocation5 + $0x14d8] sm:$0xff]
    %v610 = vld [vmem:[#allocation5 + $0x1518] sm:$0xff]
    %v611 = vld [vmem:[#allocation5 + $0x1520] sm:$0xff]
    %v612 = vld [vmem:[#allocation5 + $0x1528] sm:$0xff]
    %v613 = vld [vmem:[#allocation5 + $0x1530] sm:$0xff]
    %v614 = vld [vmem:[#allocation5 + $0x1570] sm:$0xff]
    %v615 = vld [vmem:[#allocation5 + $0x1578] sm:$0xff]
    %v616 = vld [vmem:[#allocation5 + $0x1580] sm:$0xff]
    %v617 = vld [vmem:[#allocation5 + $0x1588] sm:$0xff]
    %v618 = vld [vmem:[#allocation5 + $0x15c8] sm:$0xff]
    %v619 = vld [vmem:[#allocation5 + $0x15d0] sm:$0xff]
    %v620 = vld [vmem:[#allocation5 + $0x15d8] sm:$0xff]
    %v621 = vld [vmem:[#allocation5 + $0x15e0] sm:$0xff]
    %v622 = vld [vmem:[#allocation7 + $0x4] sm:$0xf]
    %v624 = vperm.slane %v622, 0
    %v625 = vperm.slane %v622, 1
    %v626 = vperm.slane %v622, 2
    %v627 = vperm.slane %v622, 3
    %632 = vmatpush.msra.mxu0 %v426
    %633 = vmatpush.msra.mxu0 %v422
    %634 = vmatpush.msra.mxu0 %v418
    %635 = vmatpush.msra.mxu0 %v414
    %636 = vmatpush.msra.mxu0 %v410
    %637 = vmatpush.msra.mxu0 %v406
    %638 = vmatpush.msra.mxu0 %v402
    %639 = vmatpush.msra.mxu0 %v398
    %640 = vmatpush.msra.mxu0 %v394
    %641 = vmatpush.msra.mxu0 %v390
    %642 = vmatpush.msra.mxu0 %v386
    %643 = vmatpush.msra.mxu0 %v382
    %644 = vmatpush.msra.mxu0 %v378
    %645 = vmatpush.msra.mxu0 %v374
    %646 = vmatpush.msra.mxu0 %v370
    %647 = vmatpush.msra.mxu0 %v366
    %648 = vmatmul.f32.gmra.mxu0 %v362
    %v649 = vpop.f32.mrf.mxu0
    %v650 = vadd.f32 %v624, %v649
    %651 = vdwg.mxu0
    %652 = vmatpush.msra.mxu0 %v490
    %653 = vmatpush.msra.mxu0 %v486
    %654 = vmatpush.msra.mxu0 %v482
    %655 = vmatpush.msra.mxu0 %v478
    %656 = vmatpush.msra.mxu0 %v474
    %657 = vmatpush.msra.mxu0 %v470
    %658 = vmatpush.msra.mxu0 %v466
    %659 = vmatpush.msra.mxu0 %v462
    %660 = vmatpush.msra.mxu0 %v458
    %661 = vmatpush.msra.mxu0 %v454
    %662 = vmatpush.msra.mxu0 %v450
    %663 = vmatpush.msra.mxu0 %v446
    %664 = vmatpush.msra.mxu0 %v442
    %665 = vmatpush.msra.mxu0 %v438
    %666 = vmatpush.msra.mxu0 %v434
    %667 = vmatpush.msra.mxu0 %v430
    %668 = vmatmul.f32.gmra.mxu0 %v363
    %v669 = vpop.f32.mrf.mxu0
    %v670 = vadd.f32 %v650, %v669
    %671 = vdwg.mxu0
    %672 = vmatpush.msra.mxu0 %v554
    %673 = vmatpush.msra.mxu0 %v550
    %674 = vmatpush.msra.mxu0 %v546
    %675 = vmatpush.msra.mxu0 %v542
    %676 = vmatpush.msra.mxu0 %v538
    %677 = vmatpush.msra.mxu0 %v534
    %678 = vmatpush.msra.mxu0 %v530
    %679 = vmatpush.msra.mxu0 %v526
    %680 = vmatpush.msra.mxu0 %v522
    %681 = vmatpush.msra.mxu0 %v518
    %682 = vmatpush.msra.mxu0 %v514
    %683 = vmatpush.msra.mxu0 %v510
    %684 = vmatpush.msra.mxu0 %v506
    %685 = vmatpush.msra.mxu0 %v502
    %686 = vmatpush.msra.mxu0 %v498
    %687 = vmatpush.msra.mxu0 %v494
    %688 = vmatmul.f32.gmra.mxu0 %v364
    %v689 = vpop.f32.mrf.mxu0
    %v690 = vadd.f32 %v670, %v689
    %691 = vdwg.mxu0
    %692 = vmatpush.msra.mxu0 %v618
    %693 = vmatpush.msra.mxu0 %v614
    %694 = vmatpush.msra.mxu0 %v610
    %695 = vmatpush.msra.mxu0 %v606
    %696 = vmatpush.msra.mxu0 %v602
    %697 = vmatpush.msra.mxu0 %v598
    %698 = vmatpush.msra.mxu0 %v594
    %699 = vmatpush.msra.mxu0 %v590
    %700 = vmatpush.msra.mxu0 %v586
    %701 = vmatpush.msra.mxu0 %v582
    %702 = vmatpush.msra.mxu0 %v578
    %703 = vmatpush.msra.mxu0 %v574
    %704 = vmatpush.msra.mxu0 %v570
    %705 = vmatpush.msra.mxu0 %v566
    %706 = vmatpush.msra.mxu0 %v562
    %707 = vmatpush.msra.mxu0 %v558
    %708 = vmatmul.f32.gmra.mxu0 %v365
    %v709 = vpop.f32.mrf.mxu0
    %v710 = vadd.f32 %v690, %v709
    %711 = vdwg.mxu0
    %712 = vmatpush.msra.mxu0 %v427
    %713 = vmatpush.msra.mxu0 %v423
    %714 = vmatpush.msra.mxu0 %v419
    %715 = vmatpush.msra.mxu0 %v415
    %716 = vmatpush.msra.mxu0 %v411
    %717 = vmatpush.msra.mxu0 %v407
    %718 = vmatpush.msra.mxu0 %v403
    %719 = vmatpush.msra.mxu0 %v399
    %720 = vmatpush.msra.mxu0 %v395
    %721 = vmatpush.msra.mxu0 %v391
    %722 = vmatpush.msra.mxu0 %v387
    %723 = vmatpush.msra.mxu0 %v383
    %724 = vmatpush.msra.mxu0 %v379
    %725 = vmatpush.msra.mxu0 %v375
    %726 = vmatpush.msra.mxu0 %v371
    %727 = vmatpush.msra.mxu0 %v367
    %728 = vmatmul.f32.gmra.mxu0 %v362
    %v729 = vpop.f32.mrf.mxu0
    %v730 = vadd.f32 %v625, %v729
    %731 = vdwg.mxu0
    %732 = vmatpush.msra.mxu0 %v491
    %733 = vmatpush.msra.mxu0 %v487
    %734 = vmatpush.msra.mxu0 %v483
    %735 = vmatpush.msra.mxu0 %v479
    %736 = vmatpush.msra.mxu0 %v475
    %737 = vmatpush.msra.mxu0 %v471
    %738 = vmatpush.msra.mxu0 %v467
    %739 = vmatpush.msra.mxu0 %v463
    %740 = vmatpush.msra.mxu0 %v459
    %741 = vmatpush.msra.mxu0 %v455
    %742 = vmatpush.msra.mxu0 %v451
    %743 = vmatpush.msra.mxu0 %v447
    %744 = vmatpush.msra.mxu0 %v443
    %745 = vmatpush.msra.mxu0 %v439
    %746 = vmatpush.msra.mxu0 %v435
    %747 = vmatpush.msra.mxu0 %v431
    %748 = vmatmul.f32.gmra.mxu0 %v363
    %v749 = vpop.f32.mrf.mxu0
    %v750 = vadd.f32 %v730, %v749
    %751 = vdwg.mxu0
    %752 = vmatpush.msra.mxu0 %v555
    %753 = vmatpush.msra.mxu0 %v551
    %754 = vmatpush.msra.mxu0 %v547
    %755 = vmatpush.msra.mxu0 %v543
    %756 = vmatpush.msra.mxu0 %v539
    %757 = vmatpush.msra.mxu0 %v535
    %758 = vmatpush.msra.mxu0 %v531
    %759 = vmatpush.msra.mxu0 %v527
    %760 = vmatpush.msra.mxu0 %v523
    %761 = vmatpush.msra.mxu0 %v519
    %762 = vmatpush.msra.mxu0 %v515
    %763 = vmatpush.msra.mxu0 %v511
    %764 = vmatpush.msra.mxu0 %v507
    %765 = vmatpush.msra.mxu0 %v503
    %766 = vmatpush.msra.mxu0 %v499
    %767 = vmatpush.msra.mxu0 %v495
    %768 = vmatmul.f32.gmra.mxu0 %v364
    %v769 = vpop.f32.mrf.mxu0
    %v770 = vadd.f32 %v750, %v769
    %771 = vdwg.mxu0
    %772 = vmatpush.msra.mxu0 %v619
    %773 = vmatpush.msra.mxu0 %v615
    %774 = vmatpush.msra.mxu0 %v611
    %775 = vmatpush.msra.mxu0 %v607
    %776 = vmatpush.msra.mxu0 %v603
    %777 = vmatpush.msra.mxu0 %v599
    %778 = vmatpush.msra.mxu0 %v595
    %779 = vmatpush.msra.mxu0 %v591
    %780 = vmatpush.msra.mxu0 %v587
    %781 = vmatpush.msra.mxu0 %v583
    %782 = vmatpush.msra.mxu0 %v579
    %783 = vmatpush.msra.mxu0 %v575
    %784 = vmatpush.msra.mxu0 %v571
    %785 = vmatpush.msra.mxu0 %v567
    %786 = vmatpush.msra.mxu0 %v563
    %787 = vmatpush.msra.mxu0 %v559
    %788 = vmatmul.f32.gmra.mxu0 %v365
    %v789 = vpop.f32.mrf.mxu0
    %v790 = vadd.f32 %v770, %v789
    %791 = vdwg.mxu0
    %792 = vmatpush.msra.mxu0 %v428
    %793 = vmatpush.msra.mxu0 %v424
    %794 = vmatpush.msra.mxu0 %v420
    %795 = vmatpush.msra.mxu0 %v416
    %796 = vmatpush.msra.mxu0 %v412
    %797 = vmatpush.msra.mxu0 %v408
    %798 = vmatpush.msra.mxu0 %v404
    %799 = vmatpush.msra.mxu0 %v400
    %800 = vmatpush.msra.mxu0 %v396
    %801 = vmatpush.msra.mxu0 %v392
    %802 = vmatpush.msra.mxu0 %v388
    %803 = vmatpush.msra.mxu0 %v384
    %804 = vmatpush.msra.mxu0 %v380
    %805 = vmatpush.msra.mxu0 %v376
    %806 = vmatpush.msra.mxu0 %v372
    %807 = vmatpush.msra.mxu0 %v368
    %808 = vmatmul.f32.gmra.mxu0 %v362
    %v809 = vpop.f32.mrf.mxu0
    %v810 = vadd.f32 %v626, %v809
    %811 = vdwg.mxu0
    %812 = vmatpush.msra.mxu0 %v492
    %813 = vmatpush.msra.mxu0 %v488
    %814 = vmatpush.msra.mxu0 %v484
    %815 = vmatpush.msra.mxu0 %v480
    %816 = vmatpush.msra.mxu0 %v476
    %817 = vmatpush.msra.mxu0 %v472
    %818 = vmatpush.msra.mxu0 %v468
    %819 = vmatpush.msra.mxu0 %v464
    %820 = vmatpush.msra.mxu0 %v460
    %821 = vmatpush.msra.mxu0 %v456
    %822 = vmatpush.msra.mxu0 %v452
    %823 = vmatpush.msra.mxu0 %v448
    %824 = vmatpush.msra.mxu0 %v444
    %825 = vmatpush.msra.mxu0 %v440
    %826 = vmatpush.msra.mxu0 %v436
    %827 = vmatpush.msra.mxu0 %v432
    %828 = vmatmul.f32.gmra.mxu0 %v363
    %v829 = vpop.f32.mrf.mxu0
    %v830 = vadd.f32 %v810, %v829
    %831 = vdwg.mxu0
    %832 = vmatpush.msra.mxu0 %v556
    %833 = vmatpush.msra.mxu0 %v552
    %834 = vmatpush.msra.mxu0 %v548
    %835 = vmatpush.msra.mxu0 %v544
    %836 = vmatpush.msra.mxu0 %v540
    %837 = vmatpush.msra.mxu0 %v536
    %838 = vmatpush.msra.mxu0 %v532
    %839 = vmatpush.msra.mxu0 %v528
    %840 = vmatpush.msra.mxu0 %v524
    %841 = vmatpush.msra.mxu0 %v520
    %842 = vmatpush.msra.mxu0 %v516
    %843 = vmatpush.msra.mxu0 %v512
    %844 = vmatpush.msra.mxu0 %v508
    %845 = vmatpush.msra.mxu0 %v504
    %846 = vmatpush.msra.mxu0 %v500
    %847 = vmatpush.msra.mxu0 %v496
    %848 = vmatmul.f32.gmra.mxu0 %v364
    %v849 = vpop.f32.mrf.mxu0
    %v850 = vadd.f32 %v830, %v849
    %851 = vdwg.mxu0
    %852 = vmatpush.msra.mxu0 %v620
    %853 = vmatpush.msra.mxu0 %v616
    %854 = vmatpush.msra.mxu0 %v612
    %855 = vmatpush.msra.mxu0 %v608
    %856 = vmatpush.msra.mxu0 %v604
    %857 = vmatpush.msra.mxu0 %v600
    %858 = vmatpush.msra.mxu0 %v596
    %859 = vmatpush.msra.mxu0 %v592
    %860 = vmatpush.msra.mxu0 %v588
    %861 = vmatpush.msra.mxu0 %v584
    %862 = vmatpush.msra.mxu0 %v580
    %863 = vmatpush.msra.mxu0 %v576
    %864 = vmatpush.msra.mxu0 %v572
    %865 = vmatpush.msra.mxu0 %v568
    %866 = vmatpush.msra.mxu0 %v564
    %867 = vmatpush.msra.mxu0 %v560
    %868 = vmatmul.f32.gmra.mxu0 %v365
    %v869 = vpop.f32.mrf.mxu0
    %v870 = vadd.f32 %v850, %v869
    %871 = vdwg.mxu0
    %872 = vmatpush.msra.mxu0 %v429
    %873 = vmatpush.msra.mxu0 %v425
    %874 = vmatpush.msra.mxu0 %v421
    %875 = vmatpush.msra.mxu0 %v417
    %876 = vmatpush.msra.mxu0 %v413
    %877 = vmatpush.msra.mxu0 %v409
    %878 = vmatpush.msra.mxu0 %v405
    %879 = vmatpush.msra.mxu0 %v401
    %880 = vmatpush.msra.mxu0 %v397
    %881 = vmatpush.msra.mxu0 %v393
    %882 = vmatpush.msra.mxu0 %v389
    %883 = vmatpush.msra.mxu0 %v385
    %884 = vmatpush.msra.mxu0 %v381
    %885 = vmatpush.msra.mxu0 %v377
    %886 = vmatpush.msra.mxu0 %v373
    %887 = vmatpush.msra.mxu0 %v369
    %888 = vmatmul.f32.gmra.mxu0 %v362
    %v889 = vpop.f32.mrf.mxu0
    %v890 = vadd.f32 %v627, %v889
    %891 = vdwg.mxu0
    %892 = vmatpush.msra.mxu0 %v493
    %893 = vmatpush.msra.mxu0 %v489
    %894 = vmatpush.msra.mxu0 %v485
    %895 = vmatpush.msra.mxu0 %v481
    %896 = vmatpush.msra.mxu0 %v477
    %897 = vmatpush.msra.mxu0 %v473
    %898 = vmatpush.msra.mxu0 %v469
    %899 = vmatpush.msra.mxu0 %v465
    %900 = vmatpush.msra.mxu0 %v461
    %901 = vmatpush.msra.mxu0 %v457
    %902 = vmatpush.msra.mxu0 %v453
    %903 = vmatpush.msra.mxu0 %v449
    %904 = vmatpush.msra.mxu0 %v445
    %905 = vmatpush.msra.mxu0 %v441
    %906 = vmatpush.msra.mxu0 %v437
    %907 = vmatpush.msra.mxu0 %v433
    %908 = vmatmul.f32.gmra.mxu0 %v363
    %v909 = vpop.f32.mrf.mxu0
    %v910 = vadd.f32 %v890, %v909
    %911 = vdwg.mxu0
    %912 = vmatpush.msra.mxu0 %v557
    %913 = vmatpush.msra.mxu0 %v553
    %914 = vmatpush.msra.mxu0 %v549
    %915 = vmatpush.msra.mxu0 %v545
    %916 = vmatpush.msra.mxu0 %v541
    %917 = vmatpush.msra.mxu0 %v537
    %918 = vmatpush.msra.mxu0 %v533
    %919 = vmatpush.msra.mxu0 %v529
    %920 = vmatpush.msra.mxu0 %v525
    %921 = vmatpush.msra.mxu0 %v521
    %922 = vmatpush.msra.mxu0 %v517
    %923 = vmatpush.msra.mxu0 %v513
    %924 = vmatpush.msra.mxu0 %v509
    %925 = vmatpush.msra.mxu0 %v505
    %926 = vmatpush.msra.mxu0 %v501
    %927 = vmatpush.msra.mxu0 %v497
    %928 = vmatmul.f32.gmra.mxu0 %v364
    %v929 = vpop.f32.mrf.mxu0
    %v930 = vadd.f32 %v910, %v929
    %931 = vdwg.mxu0
    %932 = vmatpush.msra.mxu0 %v621
    %933 = vmatpush.msra.mxu0 %v617
    %934 = vmatpush.msra.mxu0 %v613
    %935 = vmatpush.msra.mxu0 %v609
    %936 = vmatpush.msra.mxu0 %v605
    %937 = vmatpush.msra.mxu0 %v601
    %938 = vmatpush.msra.mxu0 %v597
    %939 = vmatpush.msra.mxu0 %v593
    %940 = vmatpush.msra.mxu0 %v589
    %941 = vmatpush.msra.mxu0 %v585
    %942 = vmatpush.msra.mxu0 %v581
    %943 = vmatpush.msra.mxu0 %v577
    %944 = vmatpush.msra.mxu0 %v573
    %945 = vmatpush.msra.mxu0 %v569
    %946 = vmatpush.msra.mxu0 %v565
    %947 = vmatpush.msra.mxu0 %v561
    %948 = vmatmul.f32.gmra.mxu0 %v365
    %v949 = vpop.f32.mrf.mxu0
    %v950 = vadd.f32 %v930, %v949
    %951 = vdwg.mxu0
    %v952 = vmul.f32 %v710, 0.01
    %v953 = vmul.f32 %v790, 0.01
    %v954 = vmul.f32 %v870, 0.01
    %v955 = vmul.f32 %v950, 0.01
    %v956 = vmax.f32 %v710, %v952
    %v957 = vmax.f32 %v790, %v953
    %v958 = vmax.f32 %v870, %v954
    %v959 = vmax.f32 %v950, %v955
    %v960 = vld [vmem:[#allocation5 + $0x40] sm:$0xff]
    %v961 = vld [vmem:[#allocation5 + $0x48] sm:$0xff]
    %v962 = vld [vmem:[#allocation5 + $0x98] sm:$0xff]
    %v963 = vld [vmem:[#allocation5 + $0xa0] sm:$0xff]
    %v964 = vld [vmem:[#allocation5 + $0xf0] sm:$0xff]
    %v965 = vld [vmem:[#allocation5 + $0xf8] sm:$0xff]
    %v966 = vld [vmem:[#allocation5 + $0x148] sm:$0xff]
    %v967 = vld [vmem:[#allocation5 + $0x150] sm:$0xff]
    %v968 = vld [vmem:[#allocation5 + $0x1a0] sm:$0xff]
    %v969 = vld [vmem:[#allocation5 + $0x1a8] sm:$0xff]
    %v970 = vld [vmem:[#allocation5 + $0x1f8] sm:$0xff]
    %v971 = vld [vmem:[#allocation5 + $0x200] sm:$0xff]
    %v972 = vld [vmem:[#allocation5 + $0x250] sm:$0xff]
    %v973 = vld [vmem:[#allocation5 + $0x258] sm:$0xff]
    %v974 = vld [vmem:[#allocation5 + $0x2a8] sm:$0xff]
    %v975 = vld [vmem:[#allocation5 + $0x2b0] sm:$0xff]
    %v976 = vld [vmem:[#allocation5 + $0x300] sm:$0xff]
    %v977 = vld [vmem:[#allocation5 + $0x308] sm:$0xff]
    %v978 = vld [vmem:[#allocation5 + $0x358] sm:$0xff]
    %v979 = vld [vmem:[#allocation5 + $0x360] sm:$0xff]
    %v980 = vld [vmem:[#allocation5 + $0x3b0] sm:$0xff]
    %v981 = vld [vmem:[#allocation5 + $0x3b8] sm:$0xff]
    %v982 = vld [vmem:[#allocation5 + $0x408] sm:$0xff]
    %v983 = vld [vmem:[#allocation5 + $0x410] sm:$0xff]
    %v984 = vld [vmem:[#allocation5 + $0x460] sm:$0xff]
    %v985 = vld [vmem:[#allocation5 + $0x468] sm:$0xff]
    %v986 = vld [vmem:[#allocation5 + $0x4b8] sm:$0xff]
    %v987 = vld [vmem:[#allocation5 + $0x4c0] sm:$0xff]
    %v988 = vld [vmem:[#allocation5 + $0x510] sm:$0xff]
    %v989 = vld [vmem:[#allocation5 + $0x518] sm:$0xff]
    %v990 = vld [vmem:[#allocation5 + $0x568] sm:$0xff]
    %v991 = vld [vmem:[#allocation5 + $0x570] sm:$0xff]
    %v992 = vld [vmem:[#allocation5 + $0x5c0] sm:$0xff]
    %v993 = vld [vmem:[#allocation5 + $0x5c8] sm:$0xff]
    %v994 = vld [vmem:[#allocation5 + $0x618] sm:$0xff]
    %v995 = vld [vmem:[#allocation5 + $0x620] sm:$0xff]
    %v996 = vld [vmem:[#allocation5 + $0x670] sm:$0xff]
    %v997 = vld [vmem:[#allocation5 + $0x678] sm:$0xff]
    %v998 = vld [vmem:[#allocation5 + $0x6c8] sm:$0xff]
    %v999 = vld [vmem:[#allocation5 + $0x6d0] sm:$0xff]
    %v1000 = vld [vmem:[#allocation5 + $0x720] sm:$0xff]
    %v1001 = vld [vmem:[#allocation5 + $0x728] sm:$0xff]
    %v1002 = vld [vmem:[#allocation5 + $0x778] sm:$0xff]
    %v1003 = vld [vmem:[#allocation5 + $0x780] sm:$0xff]
    %v1004 = vld [vmem:[#allocation5 + $0x7d0] sm:$0xff]
    %v1005 = vld [vmem:[#allocation5 + $0x7d8] sm:$0xff]
    %v1006 = vld [vmem:[#allocation5 + $0x828] sm:$0xff]
    %v1007 = vld [vmem:[#allocation5 + $0x830] sm:$0xff]
    %v1008 = vld [vmem:[#allocation5 + $0x880] sm:$0xff]
    %v1009 = vld [vmem:[#allocation5 + $0x888] sm:$0xff]
    %v1010 = vld [vmem:[#allocation5 + $0x8d8] sm:$0xff]
    %v1011 = vld [vmem:[#allocation5 + $0x8e0] sm:$0xff]
    %v1012 = vld [vmem:[#allocation5 + $0x930] sm:$0xff]
    %v1013 = vld [vmem:[#allocation5 + $0x938] sm:$0xff]
    %v1014 = vld [vmem:[#allocation5 + $0x988] sm:$0xff]
    %v1015 = vld [vmem:[#allocation5 + $0x990] sm:$0xff]
    %v1016 = vld [vmem:[#allocation5 + $0x9e0] sm:$0xff]
    %v1017 = vld [vmem:[#allocation5 + $0x9e8] sm:$0xff]
    %v1018 = vld [vmem:[#allocation5 + $0xa38] sm:$0xff]
    %v1019 = vld [vmem:[#allocation5 + $0xa40] sm:$0xff]
    %v1020 = vld [vmem:[#allocation5 + $0xa90] sm:$0xff]
    %v1021 = vld [vmem:[#allocation5 + $0xa98] sm:$0xff]
    %v1022 = vld [vmem:[#allocation5 + $0xae8] sm:$0xff]
    %v1023 = vld [vmem:[#allocation5 + $0xaf0] sm:$0xff]
    %v1024 = vld [vmem:[#allocation5 + $0xb40] sm:$0xff]
    %v1025 = vld [vmem:[#allocation5 + $0xb48] sm:$0xff]
    %v1026 = vld [vmem:[#allocation5 + $0xb98] sm:$0xff]
    %v1027 = vld [vmem:[#allocation5 + $0xba0] sm:$0xff]
    %v1028 = vld [vmem:[#allocation5 + $0xbf0] sm:$0xff]
    %v1029 = vld [vmem:[#allocation5 + $0xbf8] sm:$0xff]
    %v1030 = vld [vmem:[#allocation5 + $0xc48] sm:$0xff]
    %v1031 = vld [vmem:[#allocation5 + $0xc50] sm:$0xff]
    %v1032 = vld [vmem:[#allocation5 + $0xca0] sm:$0xff]
    %v1033 = vld [vmem:[#allocation5 + $0xca8] sm:$0xff]
    %v1034 = vld [vmem:[#allocation5 + $0xcf8] sm:$0xff]
    %v1035 = vld [vmem:[#allocation5 + $0xd00] sm:$0xff]
    %v1036 = vld [vmem:[#allocation5 + $0xd50] sm:$0xff]
    %v1037 = vld [vmem:[#allocation5 + $0xd58] sm:$0xff]
    %v1038 = vld [vmem:[#allocation5 + $0xda8] sm:$0xff]
    %v1039 = vld [vmem:[#allocation5 + $0xdb0] sm:$0xff]
    %v1040 = vld [vmem:[#allocation5 + $0xe00] sm:$0xff]
    %v1041 = vld [vmem:[#allocation5 + $0xe08] sm:$0xff]
    %v1042 = vld [vmem:[#allocation5 + $0xe58] sm:$0xff]
    %v1043 = vld [vmem:[#allocation5 + $0xe60] sm:$0xff]
    %v1044 = vld [vmem:[#allocation5 + $0xeb0] sm:$0xff]
    %v1045 = vld [vmem:[#allocation5 + $0xeb8] sm:$0xff]
    %v1046 = vld [vmem:[#allocation5 + $0xf08] sm:$0xff]
    %v1047 = vld [vmem:[#allocation5 + $0xf10] sm:$0xff]
    %v1048 = vld [vmem:[#allocation5 + $0xf60] sm:$0xff]
    %v1049 = vld [vmem:[#allocation5 + $0xf68] sm:$0xff]
    %v1050 = vld [vmem:[#allocation5 + $0xfb8] sm:$0xff]
    %v1051 = vld [vmem:[#allocation5 + $0xfc0] sm:$0xff]
    %v1052 = vld [vmem:[#allocation5 + $0x1010] sm:$0xff]
    %v1053 = vld [vmem:[#allocation5 + $0x1018] sm:$0xff]
    %v1054 = vld [vmem:[#allocation5 + $0x1068] sm:$0xff]
    %v1055 = vld [vmem:[#allocation5 + $0x1070] sm:$0xff]
    %v1056 = vld [vmem:[#allocation5 + $0x10c0] sm:$0xff]
    %v1057 = vld [vmem:[#allocation5 + $0x10c8] sm:$0xff]
    %v1058 = vld [vmem:[#allocation5 + $0x1118] sm:$0xff]
    %v1059 = vld [vmem:[#allocation5 + $0x1120] sm:$0xff]
    %v1060 = vld [vmem:[#allocation5 + $0x1170] sm:$0xff]
    %v1061 = vld [vmem:[#allocation5 + $0x1178] sm:$0xff]
    %v1062 = vld [vmem:[#allocation5 + $0x11c8] sm:$0xff]
    %v1063 = vld [vmem:[#allocation5 + $0x11d0] sm:$0xff]
    %v1064 = vld [vmem:[#allocation5 + $0x1220] sm:$0xff]
    %v1065 = vld [vmem:[#allocation5 + $0x1228] sm:$0xff]
    %v1066 = vld [vmem:[#allocation5 + $0x1278] sm:$0xff]
    %v1067 = vld [vmem:[#allocation5 + $0x1280] sm:$0xff]
    %v1068 = vld [vmem:[#allocation5 + $0x12d0] sm:$0xff]
    %v1069 = vld [vmem:[#allocation5 + $0x12d8] sm:$0xff]
    %v1070 = vld [vmem:[#allocation5 + $0x1328] sm:$0xff]
    %v1071 = vld [vmem:[#allocation5 + $0x1330] sm:$0xff]
    %v1072 = vld [vmem:[#allocation5 + $0x1380] sm:$0xff]
    %v1073 = vld [vmem:[#allocation5 + $0x1388] sm:$0xff]
    %v1074 = vld [vmem:[#allocation5 + $0x13d8] sm:$0xff]
    %v1075 = vld [vmem:[#allocation5 + $0x13e0] sm:$0xff]
    %v1076 = vld [vmem:[#allocation5 + $0x1430] sm:$0xff]
    %v1077 = vld [vmem:[#allocation5 + $0x1438] sm:$0xff]
    %v1078 = vld [vmem:[#allocation5 + $0x1488] sm:$0xff]
    %v1079 = vld [vmem:[#allocation5 + $0x1490] sm:$0xff]
    %v1080 = vld [vmem:[#allocation5 + $0x14e0] sm:$0xff]
    %v1081 = vld [vmem:[#allocation5 + $0x14e8] sm:$0xff]
    %v1082 = vld [vmem:[#allocation5 + $0x1538] sm:$0xff]
    %v1083 = vld [vmem:[#allocation5 + $0x1540] sm:$0xff]
    %v1084 = vld [vmem:[#allocation5 + $0x1590] sm:$0xff]
    %v1085 = vld [vmem:[#allocation5 + $0x1598] sm:$0xff]
    %v1086 = vld [vmem:[#allocation5 + $0x15e8] sm:$0xff]
    %v1087 = vld [vmem:[#allocation5 + $0x15f0] sm:$0xff]
    %v1088 = vld [vmem:[#allocation7 + $0x8] sm:$0x3]
    %v1090 = vperm.slane %v1088, 0
    %v1091 = vperm.slane %v1088, 1
    %1094 = vmatpush.msra.mxu0 %v990
    %1095 = vmatpush.msra.mxu0 %v988
    %1096 = vmatpush.msra.mxu0 %v986
    %1097 = vmatpush.msra.mxu0 %v984
    %1098 = vmatpush.msra.mxu0 %v982
    %1099 = vmatpush.msra.mxu0 %v980
    %1100 = vmatpush.msra.mxu0 %v978
    %1101 = vmatpush.msra.mxu0 %v976
    %1102 = vmatpush.msra.mxu0 %v974
    %1103 = vmatpush.msra.mxu0 %v972
    %1104 = vmatpush.msra.mxu0 %v970
    %1105 = vmatpush.msra.mxu0 %v968
    %1106 = vmatpush.msra.mxu0 %v966
    %1107 = vmatpush.msra.mxu0 %v964
    %1108 = vmatpush.msra.mxu0 %v962
    %1109 = vmatpush.msra.mxu0 %v960
    %1110 = vmatmul.f32.gmra.mxu0 %v956
    %v1111 = vpop.f32.mrf.mxu0
    %v1112 = vadd.f32 %v1090, %v1111
    %1113 = vdwg.mxu0
    %1114 = vmatpush.msra.mxu0 %v1022
    %1115 = vmatpush.msra.mxu0 %v1020
    %1116 = vmatpush.msra.mxu0 %v1018
    %1117 = vmatpush.msra.mxu0 %v1016
    %1118 = vmatpush.msra.mxu0 %v1014
    %1119 = vmatpush.msra.mxu0 %v1012
    %1120 = vmatpush.msra.mxu0 %v1010
    %1121 = vmatpush.msra.mxu0 %v1008
    %1122 = vmatpush.msra.mxu0 %v1006
    %1123 = vmatpush.msra.mxu0 %v1004
    %1124 = vmatpush.msra.mxu0 %v1002
    %1125 = vmatpush.msra.mxu0 %v1000
    %1126 = vmatpush.msra.mxu0 %v998
    %1127 = vmatpush.msra.mxu0 %v996
    %1128 = vmatpush.msra.mxu0 %v994
    %1129 = vmatpush.msra.mxu0 %v992
    %1130 = vmatmul.f32.gmra.mxu0 %v957
    %v1131 = vpop.f32.mrf.mxu0
    %v1132 = vadd.f32 %v1112, %v1131
    %1133 = vdwg.mxu0
    %1134 = vmatpush.msra.mxu0 %v1054
    %1135 = vmatpush.msra.mxu0 %v1052
    %1136 = vmatpush.msra.mxu0 %v1050
    %1137 = vmatpush.msra.mxu0 %v1048
    %1138 = vmatpush.msra.mxu0 %v1046
    %1139 = vmatpush.msra.mxu0 %v1044
    %1140 = vmatpush.msra.mxu0 %v1042
    %1141 = vmatpush.msra.mxu0 %v1040
    %1142 = vmatpush.msra.mxu0 %v1038
    %1143 = vmatpush.msra.mxu0 %v1036
    %1144 = vmatpush.msra.mxu0 %v1034
    %1145 = vmatpush.msra.mxu0 %v1032
    %1146 = vmatpush.msra.mxu0 %v1030
    %1147 = vmatpush.msra.mxu0 %v1028
    %1148 = vmatpush.msra.mxu0 %v1026
    %1149 = vmatpush.msra.mxu0 %v1024
    %1150 = vmatmul.f32.gmra.mxu0 %v958
    %v1151 = vpop.f32.mrf.mxu0
    %v1152 = vadd.f32 %v1132, %v1151
    %1153 = vdwg.mxu0
    %1154 = vmatpush.msra.mxu0 %v1086
    %1155 = vmatpush.msra.mxu0 %v1084
    %1156 = vmatpush.msra.mxu0 %v1082
    %1157 = vmatpush.msra.mxu0 %v1080
    %1158 = vmatpush.msra.mxu0 %v1078
    %1159 = vmatpush.msra.mxu0 %v1076
    %1160 = vmatpush.msra.mxu0 %v1074
    %1161 = vmatpush.msra.mxu0 %v1072
    %1162 = vmatpush.msra.mxu0 %v1070
    %1163 = vmatpush.msra.mxu0 %v1068
    %1164 = vmatpush.msra.mxu0 %v1066
    %1165 = vmatpush.msra.mxu0 %v1064
    %1166 = vmatpush.msra.mxu0 %v1062
    %1167 = vmatpush.msra.mxu0 %v1060
    %1168 = vmatpush.msra.mxu0 %v1058
    %1169 = vmatpush.msra.mxu0 %v1056
    %1170 = vmatmul.f32.gmra.mxu0 %v959
    %v1171 = vpop.f32.mrf.mxu0
    %v1172 = vadd.f32 %v1152, %v1171
    %1173 = vdwg.mxu0
    %1174 = vmatpush.msra.mxu0 %v991
    %1175 = vmatpush.msra.mxu0 %v989
    %1176 = vmatpush.msra.mxu0 %v987
    %1177 = vmatpush.msra.mxu0 %v985
    %1178 = vmatpush.msra.mxu0 %v983
    %1179 = vmatpush.msra.mxu0 %v981
    %1180 = vmatpush.msra.mxu0 %v979
    %1181 = vmatpush.msra.mxu0 %v977
    %1182 = vmatpush.msra.mxu0 %v975
    %1183 = vmatpush.msra.mxu0 %v973
    %1184 = vmatpush.msra.mxu0 %v971
    %1185 = vmatpush.msra.mxu0 %v969
    %1186 = vmatpush.msra.mxu0 %v967
    %1187 = vmatpush.msra.mxu0 %v965
    %1188 = vmatpush.msra.mxu0 %v963
    %1189 = vmatpush.msra.mxu0 %v961
    %1190 = vmatmul.f32.gmra.mxu0 %v956
    %v1191 = vpop.f32.mrf.mxu0
    %v1192 = vadd.f32 %v1091, %v1191
    %1193 = vdwg.mxu0
    %1194 = vmatpush.msra.mxu0 %v1023
    %1195 = vmatpush.msra.mxu0 %v1021
    %1196 = vmatpush.msra.mxu0 %v1019
    %1197 = vmatpush.msra.mxu0 %v1017
    %1198 = vmatpush.msra.mxu0 %v1015
    %1199 = vmatpush.msra.mxu0 %v1013
    %1200 = vmatpush.msra.mxu0 %v1011
    %1201 = vmatpush.msra.mxu0 %v1009
    %1202 = vmatpush.msra.mxu0 %v1007
    %1203 = vmatpush.msra.mxu0 %v1005
    %1204 = vmatpush.msra.mxu0 %v1003
    %1205 = vmatpush.msra.mxu0 %v1001
    %1206 = vmatpush.msra.mxu0 %v999
    %1207 = vmatpush.msra.mxu0 %v997
    %1208 = vmatpush.msra.mxu0 %v995
    %1209 = vmatpush.msra.mxu0 %v993
    %1210 = vmatmul.f32.gmra.mxu0 %v957
    %v1211 = vpop.f32.mrf.mxu0
    %v1212 = vadd.f32 %v1192, %v1211
    %1213 = vdwg.mxu0
    %1214 = vmatpush.msra.mxu0 %v1055
    %1215 = vmatpush.msra.mxu0 %v1053
    %1216 = vmatpush.msra.mxu0 %v1051
    %1217 = vmatpush.msra.mxu0 %v1049
    %1218 = vmatpush.msra.mxu0 %v1047
    %1219 = vmatpush.msra.mxu0 %v1045
    %1220 = vmatpush.msra.mxu0 %v1043
    %1221 = vmatpush.msra.mxu0 %v1041
    %1222 = vmatpush.msra.mxu0 %v1039
    %1223 = vmatpush.msra.mxu0 %v1037
    %1224 = vmatpush.msra.mxu0 %v1035
    %1225 = vmatpush.msra.mxu0 %v1033
    %1226 = vmatpush.msra.mxu0 %v1031
    %1227 = vmatpush.msra.mxu0 %v1029
    %1228 = vmatpush.msra.mxu0 %v1027
    %1229 = vmatpush.msra.mxu0 %v1025
    %1230 = vmatmul.f32.gmra.mxu0 %v958
    %v1231 = vpop.f32.mrf.mxu0
    %v1232 = vadd.f32 %v1212, %v1231
    %1233 = vdwg.mxu0
    %1234 = vmatpush.msra.mxu0 %v1087
    %1235 = vmatpush.msra.mxu0 %v1085
    %1236 = vmatpush.msra.mxu0 %v1083
    %1237 = vmatpush.msra.mxu0 %v1081
    %1238 = vmatpush.msra.mxu0 %v1079
    %1239 = vmatpush.msra.mxu0 %v1077
    %1240 = vmatpush.msra.mxu0 %v1075
    %1241 = vmatpush.msra.mxu0 %v1073
    %1242 = vmatpush.msra.mxu0 %v1071
    %1243 = vmatpush.msra.mxu0 %v1069
    %1244 = vmatpush.msra.mxu0 %v1067
    %1245 = vmatpush.msra.mxu0 %v1065
    %1246 = vmatpush.msra.mxu0 %v1063
    %1247 = vmatpush.msra.mxu0 %v1061
    %1248 = vmatpush.msra.mxu0 %v1059
    %1249 = vmatpush.msra.mxu0 %v1057
    %1250 = vmatmul.f32.gmra.mxu0 %v959
    %v1251 = vpop.f32.mrf.mxu0
    %v1252 = vadd.f32 %v1232, %v1251
    %1253 = vdwg.mxu0
    %v1254 = vmul.f32 %v1172, 0.01
    %v1255 = vmul.f32 %v1252, 0.01
    %v1256 = vmax.f32 %v1172, %v1254
    %v1257 = vmax.f32 %v1252, %v1255
    %v1258 = vld [vmem:[#allocation5 + $0x50] sm:$0xff]
    %v1259 = vld [vmem:[#allocation5 + $0xa8] sm:$0xff]
    %v1260 = vld [vmem:[#allocation5 + $0x100] sm:$0xff]
    %v1261 = vld [vmem:[#allocation5 + $0x158] sm:$0xff]
    %v1262 = vld [vmem:[#allocation5 + $0x1b0] sm:$0xff]
    %v1263 = vld [vmem:[#allocation5 + $0x208] sm:$0xff]
    %v1264 = vld [vmem:[#allocation5 + $0x260] sm:$0xff]
    %v1265 = vld [vmem:[#allocation5 + $0x2b8] sm:$0xff]
    %v1266 = vld [vmem:[#allocation5 + $0x310] sm:$0xff]
    %v1267 = vld [vmem:[#allocation5 + $0x368] sm:$0xff]
    %v1268 = vld [vmem:[#allocation5 + $0x3c0] sm:$0xff]
    %v1269 = vld [vmem:[#allocation5 + $0x418] sm:$0xff]
    %v1270 = vld [vmem:[#allocation5 + $0x470] sm:$0xff]
    %v1271 = vld [vmem:[#allocation5 + $0x4c8] sm:$0xff]
    %v1272 = vld [vmem:[#allocation5 + $0x520] sm:$0xff]
    %v1273 = vld [vmem:[#allocation5 + $0x578] sm:$0xff]
    %v1274 = vld [vmem:[#allocation5 + $0x5d0] sm:$0xff]
    %v1275 = vld [vmem:[#allocation5 + $0x628] sm:$0xff]
    %v1276 = vld [vmem:[#allocation5 + $0x680] sm:$0xff]
    %v1277 = vld [vmem:[#allocation5 + $0x6d8] sm:$0xff]
    %v1278 = vld [vmem:[#allocation5 + $0x730] sm:$0xff]
    %v1279 = vld [vmem:[#allocation5 + $0x788] sm:$0xff]
    %v1280 = vld [vmem:[#allocation5 + $0x7e0] sm:$0xff]
    %v1281 = vld [vmem:[#allocation5 + $0x838] sm:$0xff]
    %v1282 = vld [vmem:[#allocation5 + $0x890] sm:$0xff]
    %v1283 = vld [vmem:[#allocation5 + $0x8e8] sm:$0xff]
    %v1284 = vld [vmem:[#allocation5 + $0x940] sm:$0xff]
    %v1285 = vld [vmem:[#allocation5 + $0x998] sm:$0xff]
    %v1286 = vld [vmem:[#allocation5 + $0x9f0] sm:$0xff]
    %v1287 = vld [vmem:[#allocation5 + $0xa48] sm:$0xff]
    %v1288 = vld [vmem:[#allocation5 + $0xaa0] sm:$0xff]
    %v1289 = vld [vmem:[#allocation5 + $0xaf8] sm:$0xff]
    %v1290 = vld [vmem:[#allocation7 + $0xa] sm:$0x1]
    %v1292 = vperm.slane %v1290, 0
    %1294 = vmatpush.msra.mxu0 %v1273
    %1295 = vmatpush.msra.mxu0 %v1272
    %1296 = vmatpush.msra.mxu0 %v1271
    %1297 = vmatpush.msra.mxu0 %v1270
    %1298 = vmatpush.msra.mxu0 %v1269
    %1299 = vmatpush.msra.mxu0 %v1268
    %1300 = vmatpush.msra.mxu0 %v1267
    %1301 = vmatpush.msra.mxu0 %v1266
    %1302 = vmatpush.msra.mxu0 %v1265
    %1303 = vmatpush.msra.mxu0 %v1264
    %1304 = vmatpush.msra.mxu0 %v1263
    %1305 = vmatpush.msra.mxu0 %v1262
    %1306 = vmatpush.msra.mxu0 %v1261
    %1307 = vmatpush.msra.mxu0 %v1260
    %1308 = vmatpush.msra.mxu0 %v1259
    %1309 = vmatpush.msra.mxu0 %v1258
    %1310 = vmatmul.f32.gmra.mxu0 %v1256
    %v1311 = vpop.f32.mrf.mxu0
    %v1312 = vadd.f32 %v1292, %v1311
    %1313 = vdwg.mxu0
    %1314 = vmatpush.msra.mxu0 %v1289
    %1315 = vmatpush.msra.mxu0 %v1288
    %1316 = vmatpush.msra.mxu0 %v1287
    %1317 = vmatpush.msra.mxu0 %v1286
    %1318 = vmatpush.msra.mxu0 %v1285
    %1319 = vmatpush.msra.mxu0 %v1284
    %1320 = vmatpush.msra.mxu0 %v1283
    %1321 = vmatpush.msra.mxu0 %v1282
    %1322 = vmatpush.msra.mxu0 %v1281
    %1323 = vmatpush.msra.mxu0 %v1280
    %1324 = vmatpush.msra.mxu0 %v1279
    %1325 = vmatpush.msra.mxu0 %v1278
    %1326 = vmatpush.msra.mxu0 %v1277
    %1327 = vmatpush.msra.mxu0 %v1276
    %1328 = vmatpush.msra.mxu0 %v1275
    %1329 = vmatpush.msra.mxu0 %v1274
    %1330 = vmatmul.f32.gmra.mxu0 %v1257
    %v1331 = vpop.f32.mrf.mxu0
    %v1332 = vadd.f32 %v1312, %v1331
    %1333 = vdwg.mxu0
    %1334 = vst [vmem:[#allocation8] sm:$0xff] %v1332
    // Predicated region
    $region26: #{tpu_custom_call.1} parent=1 // pred_check
      _
    $region27: #{tpu_custom_call.1} parent=1 // pred_check_branch
      %1336 = sbr.rel (0) target = $region29
    $region28: #{tpu_custom_call.1} parent=1 // pred_region
      %1338 = vsyncadd [#allocation4], 0
      %s1340 = sshll.u32 [#allocation8], 4
      %s1341 = int_to_ptr.vmem [resolvable:$true] %s1340
      %s1342 = sshll.u32 %s3, 4
      %s1343 = int_to_ptr.hbm [resolvable:$true] %s1342
      %1345 = dma.vmem_to_hbm [thread:$0]  %s1341, 128, %s1343, [#allocation4]
    $region29: #{tpu_custom_call.1} parent=1 // pred_fallthru
      _
    // Predicated region
    $region30: #{tpu_custom_call.1} parent=1 // pred_check
      _
    $region31: #{tpu_custom_call.1} parent=1 // pred_check_branch
      %1347 = sbr.rel (0) target = $region33
    $region32: #{tpu_custom_call.1} parent=1 // pred_region
      %1349 = dma.done [#allocation4], 128
    $region33: #{tpu_custom_call.1} parent=1 // pred_fallthru
      _
    %1350 = vsyncpa [#allocation3], 1
    %1351 = vsyncpa [#allocation6], 1
    %1352 = vsyncpa [#allocation4], 1

</llo_original>
